<compile_context>
chip_gen: v7x
topology: tpu7x:2x2x1
jax: 0.10.0
libtpu: 0.0.40
codegen_flags: <defaults>
</compile_context>

<pallas_src>
import jax
import jax.numpy as jnp
from jax import lax
from jax.experimental import pallas as pl
from jax.experimental.pallas import tpu as pltpu

LANES = 128
N_OUT = 4             # number of Q-values (fc2 outputs / .view(4, 1))
ONE_LANE = 64         # lane that carries a constant 1.0 (folds the fc2 bias)
REBALANCE_STEPS = 32  # worst case: <= 8 productive decrements per entry * 4 entries


def net_kernel(x_ref, p_ref, r_ref, out_ref):
    """Fused forward pass + gated, bounded rebalance loop.

    x_ref  : VMEM (1,128) f32  lanes 0:12 = x.reshape(12), lane 12 = 1.0, rest 0
    p_ref  : VMEM (8,128) f32  packed parameters (see pack_params)
    r_ref  : VMEM (REBALANCE_STEPS,128) i32  pre-drawn non-negative random keys
    out_ref: VMEM (1,128) f32  lanes 0:4 = q values, remaining lanes 0
    """
    x_row = x_ref[...]

    # conv1d(4->1, k=3) on a length-3 input == a single dot product; the conv
    # bias rides in lane 12 (x lane = 1.0, weight lane = cb).
    # max_pool1d(kernel_size=1) is the identity.
    feat = jnp.maximum(
        jnp.sum(x_row * p_ref[0:1, :], axis=-1, keepdims=True), 0.0)        # (1,1)

    # fc1: Linear(1 -> 32) is a broadcasted scale + bias.  Lane ONE_LANE of b1
    # is 1.0 (w1 is 0 there), so h1[ONE_LANE] == 1.0 after the ReLU and the
    # fc2 bias folds into the fc2 dot products below.
    h1 = jnp.maximum(feat * p_ref[1:2, :] + p_ref[2:3, :], 0.0)             # (1,128)

    lane = lax.broadcasted_iota(jnp.int32, (1, LANES), 1)
    out_mask = lane < N_OUT

    # fc2: Linear(32 -> 4) as ONE fused lane reduction over a (4,128) tile
    # (VPU multiply + XLU reduce), then a sublane scatter onto lanes 0..3.
    # Deliberately kept OFF the MXU (1x32@32x4 would waste an MXU round trip).
    hcol = jnp.sum(h1 * p_ref[3:3 + N_OUT, :], axis=-1, keepdims=True)      # (4,1)
    lane4 = lax.broadcasted_iota(jnp.int32, (N_OUT, LANES), 1)
    row4 = lax.broadcasted_iota(jnp.int32, (N_OUT, LANES), 0)
    h2 = jnp.sum(jnp.where(lane4 == row4, hcol, 0.0), axis=0, keepdims=True)  # (1,128)

    # ReLU before clamp(min=1, max=9) is redundant: the clamp floor dominates.
    q = jnp.where(out_mask, jnp.clip(h2, 1.0, 9.0), 0.0)                    # (1,128)
    out_ref[...] = q

    s0 = jnp.sum(q, axis=-1, keepdims=True)                                  # (1,1)

    # Rebalance: while sum > 10, decrement a uniformly-random entry, re-clamp.
    # In torch, picks of entries already at the clamp floor (== 1.0) are
    # no-ops, so picking uniformly among entries > 1.0 is the rejection-sampled
    # equivalent; every such step is productive, which bounds the trip count by
    # REBALANCE_STEPS.  The whole loop is skipped when the sum is already <= 10.
    # TODO(synk): torch uses host RNG + .item(); the pre-drawn jax.random keys
    # are distribution-equivalent but not bit-identical to the torch RNG stream.
    @pl.when(s0[0, 0] > 10.0)
    def _():
        def body(step, carry):
            qv, s = carry
            active = s > 10.0                                        # (1,1) bool
            bits = r_ref[pl.ds(step, 1), :]                          # (1,128) i32 >= 0
            # Mix the lane index into the low bits -> distinct keys, so the
            # argmax pick is provably one-hot (no multi-lane tie decrements).
            key = (bits & jnp.int32(0x7FFFFF80)) | lane
            eligible = out_mask & (qv > 1.0)
            key_m = jnp.where(eligible, key, jnp.int32(-1))
            key_max = jnp.max(key_m, axis=-1, keepdims=True)         # (1,1)
            pick = eligible & (key_m == key_max)                     # one-hot
            # torch: q[idx] -= 1 then clamp(1, 9)  ==  decrement by min(1, q-1)
            dec = jnp.where(pick & active, jnp.minimum(1.0, qv - 1.0), 0.0)
            applied = jnp.sum(dec, axis=-1, keepdims=True)           # (1,1)
            return qv - dec, s - applied

        qf, _ = lax.fori_loop(0, REBALANCE_STEPS, body, (q, s0), unroll=True)
        out_ref[...] = qf


def pack_params(cw, cb, w1, b1, w2, b2):
    """One-time packing of all layer parameters into a single (8,128) slab.

    row 0   : conv1 weight (lanes 0:12) + conv1 bias at lane 12
    row 1   : fc1 weight (lanes 0:32)
    row 2   : fc1 bias (lanes 0:32), constant 1.0 at lane ONE_LANE
    row 3+j : fc2 weight row j (lanes 0:32), fc2 bias b2[j] at lane ONE_LANE
    row 7   : unused (zeros)
    """
    p = jnp.zeros((8, LANES), jnp.float32)
    p = p.at[0, :12].set(cw.reshape(12).astype(jnp.float32))
    p = p.at[0, 12].set(cb[0])
    p = p.at[1, :32].set(w1.reshape(32))
    p = p.at[2, :32].set(b1)
    p = p.at[2, ONE_LANE].set(1.0)
    p = p.at[3:3 + N_OUT, :32].set(w2)
    p = p.at[3:3 + N_OUT, ONE_LANE].set(b2)
    return p


@jax.jit
def net_forward(x, packed_params, rng_key):
    """x: (1,4,3) f32 NCL; packed_params: (8,128) f32; rng_key: jax PRNG key.
    Returns (4, 1) f32, like the torch module."""
    x_row = jnp.concatenate(
        [x.reshape(1, 12).astype(jnp.float32),
         jnp.ones((1, 1), jnp.float32),                 # multiplies the conv-bias lane
         jnp.zeros((1, LANES - 13), jnp.float32)],
        axis=1)

    # Pre-drawn random keys for the (at most REBALANCE_STEPS) rebalance picks.
    rbits = jax.random.randint(
        rng_key, (REBALANCE_STEPS, LANES), 0, jnp.iinfo(jnp.int32).max,
        dtype=jnp.int32)

    out = pl.pallas_call(
        net_kernel,
        out_shape=jax.ShapeDtypeStruct((1, LANES), jnp.float32),
        in_specs=[
            pl.BlockSpec(memory_space=pltpu.MemorySpace.VMEM),   # packed x row
            pl.BlockSpec(memory_space=pltpu.MemorySpace.VMEM),   # packed params
            pl.BlockSpec(memory_space=pltpu.MemorySpace.VMEM),   # random keys
        ],
        out_specs=pl.BlockSpec(memory_space=pltpu.MemorySpace.VMEM),
    )(x_row, packed_params, rbits)
    return out[0, :N_OUT].reshape(N_OUT, 1)


if __name__ == "__main__":
    root = jax.random.PRNGKey(0)
    ks = jax.random.split(root, 8)

    # Deterministic parameter init (shapes from the module's __init__):
    #   conv1: Conv1d(4, 1, 3)  -> weight (1, 4, 3), bias (1,)
    #   fc1:   Linear(1, 32)    -> weight (32, 1) ~ N(0, 0.1), bias (32,)
    #   fc2:   Linear(32, 4)    -> weight (4, 32) ~ N(0, 0.1), bias (4,)
    bound_c = 1.0 / jnp.sqrt(12.0)
    cw = jax.random.uniform(ks[0], (1, 4, 3), jnp.float32, -bound_c, bound_c)
    cb = jax.random.uniform(ks[1], (1,), jnp.float32, -bound_c, bound_c)
    w1 = 0.1 * jax.random.normal(ks[2], (32, 1), jnp.float32)
    b1 = jax.random.uniform(ks[3], (32,), jnp.float32, -1.0, 1.0)
    w2 = 0.1 * jax.random.normal(ks[4], (4, 32), jnp.float32)
    bound2 = 1.0 / jnp.sqrt(32.0)
    b2 = jax.random.uniform(ks[5], (4,), jnp.float32, -bound2, bound2)

    # Input: (batch=1, channels=4, length=3) — the only shape the module admits.
    x = jax.random.normal(ks[6], (1, 4, 3), jnp.float32)

    packed = pack_params(cw, cb, w1, b1, w2, b2)   # one-time parameter packing

    out = net_forward(x, packed, ks[7])
    jax.block_until_ready(out)

    # Pure-JAX reference of the deterministic (pre-rebalance) part.
    feat = jnp.maximum(jnp.sum(cw.reshape(12) * x.reshape(12)) + cb[0], 0.0)
    h1 = jnp.maximum(feat * w1.reshape(32) + b1, 0.0)
    q_ref = jnp.clip(w2 @ h1 + b2, 1.0, 9.0).reshape(N_OUT, 1)
    s_ref = float(q_ref.sum())

    assert out.shape == (N_OUT, 1)
    assert bool(jnp.all(out >= 1.0 - 1e-5)) and bool(jnp.all(out <= 9.0 + 1e-5))
    # The rebalance loop only ever decrements entries.
    assert bool(jnp.all(out <= q_ref + 1e-4))
    if s_ref <= 10.0 - 1e-3:          # no rebalance -> exact (up to fp reassoc)
        assert bool(jnp.allclose(out, q_ref, atol=1e-4))
    if s_ref > 10.0 + 1e-3:           # rebalance must have brought the sum down
        assert float(out.sum()) <= 10.0 + 1e-3
    print("KERNEL_OK")
</pallas_src>

<mosaic_0001>
module attributes {stable_mosaic.version = 11 : i64} {
  func.func @net_kernel(%arg0: memref<1x128xf32, #tpu.memory_space<vmem>>, %arg1: memref<8x128xf32, #tpu.memory_space<vmem>>, %arg2: memref<32x128xi32, #tpu.memory_space<vmem>>, %arg3: memref<1x128xf32, #tpu.memory_space<vmem>>) attributes {dimension_semantics = [], scalar_prefetch = 0 : i64, scratch_operands = 0 : i64, tpu.core_type = #tpu.core_type<tc>} {
    %c0 = arith.constant 0 : index
    %c0_0 = arith.constant 0 : index
    %0 = vector.load %arg0[%c0, %c0_0] : memref<1x128xf32, #tpu.memory_space<vmem>>, vector<1x128xf32>
    %c0_1 = arith.constant 0 : index
    %c0_2 = arith.constant 0 : index
    %1 = vector.load %arg1[%c0_1, %c0_2] : memref<8x128xf32, #tpu.memory_space<vmem>>, vector<1x128xf32>
    %2 = arith.mulf %0, %1 : vector<1x128xf32>
    %cst = arith.constant dense<0.000000e+00> : vector<1xf32>
    %3 = vector.multi_reduction <add>, %2, %cst [1] : vector<1x128xf32> to vector<1xf32>
    %4 = vector.shape_cast %3 : vector<1xf32> to vector<1x1xf32>
    %cst_3 = arith.constant 0.000000e+00 : f32
    %5 = vector.broadcast %cst_3 : f32 to vector<1x1xf32>
    %6 = arith.maximumf %4, %5 : vector<1x1xf32>
    %c1 = arith.constant 1 : index
    %c0_4 = arith.constant 0 : index
    %7 = vector.load %arg1[%c1, %c0_4] : memref<8x128xf32, #tpu.memory_space<vmem>>, vector<1x128xf32>
    %8 = vector.broadcast %6 : vector<1x1xf32> to vector<1x128xf32>
    %9 = arith.mulf %8, %7 : vector<1x128xf32>
    %c2 = arith.constant 2 : index
    %c0_5 = arith.constant 0 : index
    %10 = vector.load %arg1[%c2, %c0_5] : memref<8x128xf32, #tpu.memory_space<vmem>>, vector<1x128xf32>
    %11 = arith.addf %9, %10 : vector<1x128xf32>
    %cst_6 = arith.constant 0.000000e+00 : f32
    %12 = vector.broadcast %cst_6 : f32 to vector<1x128xf32>
    %13 = arith.maximumf %11, %12 : vector<1x128xf32>
    %14 = tpu.iota {dimensions = array<i32: 1>} : vector<1x128xi32>
    %c4_i32 = arith.constant 4 : i32
    %15 = vector.broadcast %c4_i32 : i32 to vector<1x128xi32>
    %16 = arith.cmpi slt, %14, %15 : vector<1x128xi32>
    %c3 = arith.constant 3 : index
    %c0_7 = arith.constant 0 : index
    %17 = vector.load %arg1[%c3, %c0_7] : memref<8x128xf32, #tpu.memory_space<vmem>>, vector<4x128xf32>
    %18 = vector.broadcast %13 : vector<1x128xf32> to vector<4x128xf32>
    %19 = arith.mulf %18, %17 : vector<4x128xf32>
    %cst_8 = arith.constant dense<0.000000e+00> : vector<4xf32>
    %20 = vector.multi_reduction <add>, %19, %cst_8 [1] : vector<4x128xf32> to vector<4xf32>
    %21 = vector.shape_cast %20 : vector<4xf32> to vector<4x1xf32>
    %22 = tpu.iota {dimensions = array<i32: 1>} : vector<4x128xi32>
    %23 = tpu.iota {dimensions = array<i32: 0>} : vector<4x128xi32>
    %24 = arith.cmpi eq, %22, %23 : vector<4x128xi32>
    %cst_9 = arith.constant 0.000000e+00 : f32
    %25 = vector.shape_cast %21 : vector<4x1xf32> to vector<4x1xf32>
    %26 = vector.broadcast %25 : vector<4x1xf32> to vector<4x128xf32>
    %27 = vector.broadcast %cst_9 : f32 to vector<4x128xf32>
    %28 = arith.select %24, %26, %27 : vector<4x128xi1>, vector<4x128xf32>
    %cst_10 = arith.constant dense<0.000000e+00> : vector<128xf32>
    %29 = vector.multi_reduction <add>, %28, %cst_10 [0] : vector<4x128xf32> to vector<128xf32>
    %30 = vector.shape_cast %29 : vector<128xf32> to vector<1x128xf32>
    %cst_11 = arith.constant 1.000000e+00 : f32
    %cst_12 = arith.constant 9.000000e+00 : f32
    %31 = vector.broadcast %cst_11 : f32 to vector<1x128xf32>
    %32 = arith.maximumf %31, %30 : vector<1x128xf32>
    %33 = vector.broadcast %cst_12 : f32 to vector<1x128xf32>
    %34 = arith.minimumf %33, %32 : vector<1x128xf32>
    %cst_13 = arith.constant 0.000000e+00 : f32
    %35 = vector.broadcast %cst_13 : f32 to vector<1x128xf32>
    %36 = arith.select %16, %34, %35 : vector<1x128xi1>, vector<1x128xf32>
    %c0_14 = arith.constant 0 : index
    %c0_15 = arith.constant 0 : index
    %37 = vector.load %arg3[%c0_14, %c0_15] : memref<1x128xf32, #tpu.memory_space<vmem>>, vector<1x128xf32>
    tpu.vector_store %arg3[%c0_14, %c0_15], %36 {strides = array<i32>} : memref<1x128xf32, #tpu.memory_space<vmem>>, vector<1x128xf32>,
    %cst_16 = arith.constant dense<0.000000e+00> : vector<1xf32>
    %38 = vector.multi_reduction <add>, %36, %cst_16 [1] : vector<1x128xf32> to vector<1xf32>
    %39 = vector.shape_cast %38 : vector<1xf32> to vector<1x1xf32>
    %40 = vector.extract %39[0, 0] : f32 from vector<1x1xf32>
    %cst_17 = arith.constant 1.000000e+01 : f32
    %41 = arith.cmpf ogt, %40, %cst_17 : f32
    %42 = arith.extui %41 : i1 to i32
    %c0_i32 = arith.constant 0 : i32
    %43 = arith.cmpi ne, %42, %c0_i32 : i32
    scf.if %43 {
      %c0_i32_18 = arith.constant 0 : i32
      %cst_19 = arith.constant 1.000000e+01 : f32
      %44 = vector.broadcast %cst_19 : f32 to vector<1x1xf32>
      %45 = arith.cmpf ogt, %39, %44 : vector<1x1xf32>
      %46 = arith.index_cast %c0_i32_18 : i32 to index
      %c0_20 = arith.constant 0 : index
      %47 = vector.load %arg2[%46, %c0_20] : memref<32x128xi32, #tpu.memory_space<vmem>>, vector<1x128xi32>
      %c2147483520_i32 = arith.constant 2147483520 : i32
      %48 = vector.broadcast %c2147483520_i32 : i32 to vector<1x128xi32>
      %49 = arith.andi %47, %48 : vector<1x128xi32>
      %50 = arith.ori %49, %14 : vector<1x128xi32>
      %cst_21 = arith.constant 1.000000e+00 : f32
      %51 = vector.broadcast %cst_21 : f32 to vector<1x128xf32>
      %52 = arith.cmpf ogt, %36, %51 : vector<1x128xf32>
      %53 = arith.andi %16, %52 : vector<1x128xi1>
      %c-1_i32 = arith.constant -1 : i32
      %54 = vector.broadcast %c-1_i32 : i32 to vector<1x128xi32>
      %55 = arith.select %53, %50, %54 : vector<1x128xi1>, vector<1x128xi32>
      %cst_22 = arith.constant dense<-2147483648> : vector<1xi32>
      %56 = vector.multi_reduction <maxsi>, %55, %cst_22 [1] : vector<1x128xi32> to vector<1xi32>
      %57 = vector.shape_cast %56 : vector<1xi32> to vector<1x1xi32>
      %58 = vector.broadcast %57 : vector<1x1xi32> to vector<1x128xi32>
      %59 = arith.cmpi eq, %55, %58 : vector<1x128xi32>
      %60 = arith.andi %53, %59 : vector<1x128xi1>
      %61 = vector.broadcast %45 : vector<1x1xi1> to vector<1x128xi1>
      %62 = arith.andi %60, %61 : vector<1x128xi1>
      %cst_23 = arith.constant 1.000000e+00 : f32
      %63 = vector.broadcast %cst_23 : f32 to vector<1x128xf32>
      %64 = arith.subf %36, %63 : vector<1x128xf32>
      %cst_24 = arith.constant 1.000000e+00 : f32
      %65 = vector.broadcast %cst_24 : f32 to vector<1x128xf32>
      %66 = arith.minimumf %65, %64 : vector<1x128xf32>
      %cst_25 = arith.constant 0.000000e+00 : f32
      %67 = vector.broadcast %cst_25 : f32 to vector<1x128xf32>
      %68 = arith.select %62, %66, %67 : vector<1x128xi1>, vector<1x128xf32>
      %cst_26 = arith.constant dense<0.000000e+00> : vector<1xf32>
      %69 = vector.multi_reduction <add>, %68, %cst_26 [1] : vector<1x128xf32> to vector<1xf32>
      %70 = vector.shape_cast %69 : vector<1xf32> to vector<1x1xf32>
      %71 = arith.subf %36, %68 : vector<1x128xf32>
      %72 = arith.subf %39, %70 : vector<1x1xf32>
      %c1_i32 = arith.constant 1 : i32
      %cst_27 = arith.constant 1.000000e+01 : f32
      %73 = vector.broadcast %cst_27 : f32 to vector<1x1xf32>
      %74 = arith.cmpf ogt, %72, %73 : vector<1x1xf32>
      %75 = arith.index_cast %c1_i32 : i32 to index
      %c0_28 = arith.constant 0 : index
      %76 = vector.load %arg2[%75, %c0_28] : memref<32x128xi32, #tpu.memory_space<vmem>>, vector<1x128xi32>
      %c2147483520_i32_29 = arith.constant 2147483520 : i32
      %77 = vector.broadcast %c2147483520_i32_29 : i32 to vector<1x128xi32>
      %78 = arith.andi %76, %77 : vector<1x128xi32>
      %79 = arith.ori %78, %14 : vector<1x128xi32>
      %cst_30 = arith.constant 1.000000e+00 : f32
      %80 = vector.broadcast %cst_30 : f32 to vector<1x128xf32>
      %81 = arith.cmpf ogt, %71, %80 : vector<1x128xf32>
      %82 = arith.andi %16, %81 : vector<1x128xi1>
      %c-1_i32_31 = arith.constant -1 : i32
      %83 = vector.broadcast %c-1_i32_31 : i32 to vector<1x128xi32>
      %84 = arith.select %82, %79, %83 : vector<1x128xi1>, vector<1x128xi32>
      %cst_32 = arith.constant dense<-2147483648> : vector<1xi32>
      %85 = vector.multi_reduction <maxsi>, %84, %cst_32 [1] : vector<1x128xi32> to vector<1xi32>
      %86 = vector.shape_cast %85 : vector<1xi32> to vector<1x1xi32>
      %87 = vector.broadcast %86 : vector<1x1xi32> to vector<1x128xi32>
      %88 = arith.cmpi eq, %84, %87 : vector<1x128xi32>
      %89 = arith.andi %82, %88 : vector<1x128xi1>
      %90 = vector.broadcast %74 : vector<1x1xi1> to vector<1x128xi1>
      %91 = arith.andi %89, %90 : vector<1x128xi1>
      %cst_33 = arith.constant 1.000000e+00 : f32
      %92 = vector.broadcast %cst_33 : f32 to vector<1x128xf32>
      %93 = arith.subf %71, %92 : vector<1x128xf32>
      %cst_34 = arith.constant 1.000000e+00 : f32
      %94 = vector.broadcast %cst_34 : f32 to vector<1x128xf32>
      %95 = arith.minimumf %94, %93 : vector<1x128xf32>
      %cst_35 = arith.constant 0.000000e+00 : f32
      %96 = vector.broadcast %cst_35 : f32 to vector<1x128xf32>
      %97 = arith.select %91, %95, %96 : vector<1x128xi1>, vector<1x128xf32>
      %cst_36 = arith.constant dense<0.000000e+00> : vector<1xf32>
      %98 = vector.multi_reduction <add>, %97, %cst_36 [1] : vector<1x128xf32> to vector<1xf32>
      %99 = vector.shape_cast %98 : vector<1xf32> to vector<1x1xf32>
      %100 = arith.subf %71, %97 : vector<1x128xf32>
      %101 = arith.subf %72, %99 : vector<1x1xf32>
      %c2_i32 = arith.constant 2 : i32
      %cst_37 = arith.constant 1.000000e+01 : f32
      %102 = vector.broadcast %cst_37 : f32 to vector<1x1xf32>
      %103 = arith.cmpf ogt, %101, %102 : vector<1x1xf32>
      %104 = arith.index_cast %c2_i32 : i32 to index
      %c0_38 = arith.constant 0 : index
      %105 = vector.load %arg2[%104, %c0_38] : memref<32x128xi32, #tpu.memory_space<vmem>>, vector<1x128xi32>
      %c2147483520_i32_39 = arith.constant 2147483520 : i32
      %106 = vector.broadcast %c2147483520_i32_39 : i32 to vector<1x128xi32>
      %107 = arith.andi %105, %106 : vector<1x128xi32>
      %108 = arith.ori %107, %14 : vector<1x128xi32>
      %cst_40 = arith.constant 1.000000e+00 : f32
      %109 = vector.broadcast %cst_40 : f32 to vector<1x128xf32>
      %110 = arith.cmpf ogt, %100, %109 : vector<1x128xf32>
      %111 = arith.andi %16, %110 : vector<1x128xi1>
      %c-1_i32_41 = arith.constant -1 : i32
      %112 = vector.broadcast %c-1_i32_41 : i32 to vector<1x128xi32>
      %113 = arith.select %111, %108, %112 : vector<1x128xi1>, vector<1x128xi32>
      %cst_42 = arith.constant dense<-2147483648> : vector<1xi32>
      %114 = vector.multi_reduction <maxsi>, %113, %cst_42 [1] : vector<1x128xi32> to vector<1xi32>
      %115 = vector.shape_cast %114 : vector<1xi32> to vector<1x1xi32>
      %116 = vector.broadcast %115 : vector<1x1xi32> to vector<1x128xi32>
      %117 = arith.cmpi eq, %113, %116 : vector<1x128xi32>
      %118 = arith.andi %111, %117 : vector<1x128xi1>
      %119 = vector.broadcast %103 : vector<1x1xi1> to vector<1x128xi1>
      %120 = arith.andi %118, %119 : vector<1x128xi1>
      %cst_43 = arith.constant 1.000000e+00 : f32
      %121 = vector.broadcast %cst_43 : f32 to vector<1x128xf32>
      %122 = arith.subf %100, %121 : vector<1x128xf32>
      %cst_44 = arith.constant 1.000000e+00 : f32
      %123 = vector.broadcast %cst_44 : f32 to vector<1x128xf32>
      %124 = arith.minimumf %123, %122 : vector<1x128xf32>
      %cst_45 = arith.constant 0.000000e+00 : f32
      %125 = vector.broadcast %cst_45 : f32 to vector<1x128xf32>
      %126 = arith.select %120, %124, %125 : vector<1x128xi1>, vector<1x128xf32>
      %cst_46 = arith.constant dense<0.000000e+00> : vector<1xf32>
      %127 = vector.multi_reduction <add>, %126, %cst_46 [1] : vector<1x128xf32> to vector<1xf32>
      %128 = vector.shape_cast %127 : vector<1xf32> to vector<1x1xf32>
      %129 = arith.subf %100, %126 : vector<1x128xf32>
      %130 = arith.subf %101, %128 : vector<1x1xf32>
      %c3_i32 = arith.constant 3 : i32
      %cst_47 = arith.constant 1.000000e+01 : f32
      %131 = vector.broadcast %cst_47 : f32 to vector<1x1xf32>
      %132 = arith.cmpf ogt, %130, %131 : vector<1x1xf32>
      %133 = arith.index_cast %c3_i32 : i32 to index
      %c0_48 = arith.constant 0 : index
      %134 = vector.load %arg2[%133, %c0_48] : memref<32x128xi32, #tpu.memory_space<vmem>>, vector<1x128xi32>
      %c2147483520_i32_49 = arith.constant 2147483520 : i32
      %135 = vector.broadcast %c2147483520_i32_49 : i32 to vector<1x128xi32>
      %136 = arith.andi %134, %135 : vector<1x128xi32>
      %137 = arith.ori %136, %14 : vector<1x128xi32>
      %cst_50 = arith.constant 1.000000e+00 : f32
      %138 = vector.broadcast %cst_50 : f32 to vector<1x128xf32>
      %139 = arith.cmpf ogt, %129, %138 : vector<1x128xf32>
      %140 = arith.andi %16, %139 : vector<1x128xi1>
      %c-1_i32_51 = arith.constant -1 : i32
      %141 = vector.broadcast %c-1_i32_51 : i32 to vector<1x128xi32>
      %142 = arith.select %140, %137, %141 : vector<1x128xi1>, vector<1x128xi32>
      %cst_52 = arith.constant dense<-2147483648> : vector<1xi32>
      %143 = vector.multi_reduction <maxsi>, %142, %cst_52 [1] : vector<1x128xi32> to vector<1xi32>
      %144 = vector.shape_cast %143 : vector<1xi32> to vector<1x1xi32>
      %145 = vector.broadcast %144 : vector<1x1xi32> to vector<1x128xi32>
      %146 = arith.cmpi eq, %142, %145 : vector<1x128xi32>
      %147 = arith.andi %140, %146 : vector<1x128xi1>
      %148 = vector.broadcast %132 : vector<1x1xi1> to vector<1x128xi1>
      %149 = arith.andi %147, %148 : vector<1x128xi1>
      %cst_53 = arith.constant 1.000000e+00 : f32
      %150 = vector.broadcast %cst_53 : f32 to vector<1x128xf32>
      %151 = arith.subf %129, %150 : vector<1x128xf32>
      %cst_54 = arith.constant 1.000000e+00 : f32
      %152 = vector.broadcast %cst_54 : f32 to vector<1x128xf32>
      %153 = arith.minimumf %152, %151 : vector<1x128xf32>
      %cst_55 = arith.constant 0.000000e+00 : f32
      %154 = vector.broadcast %cst_55 : f32 to vector<1x128xf32>
      %155 = arith.select %149, %153, %154 : vector<1x128xi1>, vector<1x128xf32>
      %cst_56 = arith.constant dense<0.000000e+00> : vector<1xf32>
      %156 = vector.multi_reduction <add>, %155, %cst_56 [1] : vector<1x128xf32> to vector<1xf32>
      %157 = vector.shape_cast %156 : vector<1xf32> to vector<1x1xf32>
      %158 = arith.subf %129, %155 : vector<1x128xf32>
      %159 = arith.subf %130, %157 : vector<1x1xf32>
      %c4_i32_57 = arith.constant 4 : i32
      %cst_58 = arith.constant 1.000000e+01 : f32
      %160 = vector.broadcast %cst_58 : f32 to vector<1x1xf32>
      %161 = arith.cmpf ogt, %159, %160 : vector<1x1xf32>
      %162 = arith.index_cast %c4_i32_57 : i32 to index
      %c0_59 = arith.constant 0 : index
      %163 = vector.load %arg2[%162, %c0_59] : memref<32x128xi32, #tpu.memory_space<vmem>>, vector<1x128xi32>
      %c2147483520_i32_60 = arith.constant 2147483520 : i32
      %164 = vector.broadcast %c2147483520_i32_60 : i32 to vector<1x128xi32>
      %165 = arith.andi %163, %164 : vector<1x128xi32>
      %166 = arith.ori %165, %14 : vector<1x128xi32>
      %cst_61 = arith.constant 1.000000e+00 : f32
      %167 = vector.broadcast %cst_61 : f32 to vector<1x128xf32>
      %168 = arith.cmpf ogt, %158, %167 : vector<1x128xf32>
      %169 = arith.andi %16, %168 : vector<1x128xi1>
      %c-1_i32_62 = arith.constant -1 : i32
      %170 = vector.broadcast %c-1_i32_62 : i32 to vector<1x128xi32>
      %171 = arith.select %169, %166, %170 : vector<1x128xi1>, vector<1x128xi32>
      %cst_63 = arith.constant dense<-2147483648> : vector<1xi32>
      %172 = vector.multi_reduction <maxsi>, %171, %cst_63 [1] : vector<1x128xi32> to vector<1xi32>
      %173 = vector.shape_cast %172 : vector<1xi32> to vector<1x1xi32>
      %174 = vector.broadcast %173 : vector<1x1xi32> to vector<1x128xi32>
      %175 = arith.cmpi eq, %171, %174 : vector<1x128xi32>
      %176 = arith.andi %169, %175 : vector<1x128xi1>
      %177 = vector.broadcast %161 : vector<1x1xi1> to vector<1x128xi1>
      %178 = arith.andi %176, %177 : vector<1x128xi1>
      %cst_64 = arith.constant 1.000000e+00 : f32
      %179 = vector.broadcast %cst_64 : f32 to vector<1x128xf32>
      %180 = arith.subf %158, %179 : vector<1x128xf32>
      %cst_65 = arith.constant 1.000000e+00 : f32
      %181 = vector.broadcast %cst_65 : f32 to vector<1x128xf32>
      %182 = arith.minimumf %181, %180 : vector<1x128xf32>
      %cst_66 = arith.constant 0.000000e+00 : f32
      %183 = vector.broadcast %cst_66 : f32 to vector<1x128xf32>
      %184 = arith.select %178, %182, %183 : vector<1x128xi1>, vector<1x128xf32>
      %cst_67 = arith.constant dense<0.000000e+00> : vector<1xf32>
      %185 = vector.multi_reduction <add>, %184, %cst_67 [1] : vector<1x128xf32> to vector<1xf32>
      %186 = vector.shape_cast %185 : vector<1xf32> to vector<1x1xf32>
      %187 = arith.subf %158, %184 : vector<1x128xf32>
      %188 = arith.subf %159, %186 : vector<1x1xf32>
      %c5_i32 = arith.constant 5 : i32
      %cst_68 = arith.constant 1.000000e+01 : f32
      %189 = vector.broadcast %cst_68 : f32 to vector<1x1xf32>
      %190 = arith.cmpf ogt, %188, %189 : vector<1x1xf32>
      %191 = arith.index_cast %c5_i32 : i32 to index
      %c0_69 = arith.constant 0 : index
      %192 = vector.load %arg2[%191, %c0_69] : memref<32x128xi32, #tpu.memory_space<vmem>>, vector<1x128xi32>
      %c2147483520_i32_70 = arith.constant 2147483520 : i32
      %193 = vector.broadcast %c2147483520_i32_70 : i32 to vector<1x128xi32>
      %194 = arith.andi %192, %193 : vector<1x128xi32>
      %195 = arith.ori %194, %14 : vector<1x128xi32>
      %cst_71 = arith.constant 1.000000e+00 : f32
      %196 = vector.broadcast %cst_71 : f32 to vector<1x128xf32>
      %197 = arith.cmpf ogt, %187, %196 : vector<1x128xf32>
      %198 = arith.andi %16, %197 : vector<1x128xi1>
      %c-1_i32_72 = arith.constant -1 : i32
      %199 = vector.broadcast %c-1_i32_72 : i32 to vector<1x128xi32>
      %200 = arith.select %198, %195, %199 : vector<1x128xi1>, vector<1x128xi32>
      %cst_73 = arith.constant dense<-2147483648> : vector<1xi32>
      %201 = vector.multi_reduction <maxsi>, %200, %cst_73 [1] : vector<1x128xi32> to vector<1xi32>
      %202 = vector.shape_cast %201 : vector<1xi32> to vector<1x1xi32>
      %203 = vector.broadcast %202 : vector<1x1xi32> to vector<1x128xi32>
      %204 = arith.cmpi eq, %200, %203 : vector<1x128xi32>
      %205 = arith.andi %198, %204 : vector<1x128xi1>
      %206 = vector.broadcast %190 : vector<1x1xi1> to vector<1x128xi1>
      %207 = arith.andi %205, %206 : vector<1x128xi1>
      %cst_74 = arith.constant 1.000000e+00 : f32
      %208 = vector.broadcast %cst_74 : f32 to vector<1x128xf32>
      %209 = arith.subf %187, %208 : vector<1x128xf32>
      %cst_75 = arith.constant 1.000000e+00 : f32
      %210 = vector.broadcast %cst_75 : f32 to vector<1x128xf32>
      %211 = arith.minimumf %210, %209 : vector<1x128xf32>
      %cst_76 = arith.constant 0.000000e+00 : f32
      %212 = vector.broadcast %cst_76 : f32 to vector<1x128xf32>
      %213 = arith.select %207, %211, %212 : vector<1x128xi1>, vector<1x128xf32>
      %cst_77 = arith.constant dense<0.000000e+00> : vector<1xf32>
      %214 = vector.multi_reduction <add>, %213, %cst_77 [1] : vector<1x128xf32> to vector<1xf32>
      %215 = vector.shape_cast %214 : vector<1xf32> to vector<1x1xf32>
      %216 = arith.subf %187, %213 : vector<1x128xf32>
      %217 = arith.subf %188, %215 : vector<1x1xf32>
      %c6_i32 = arith.constant 6 : i32
      %cst_78 = arith.constant 1.000000e+01 : f32
      %218 = vector.broadcast %cst_78 : f32 to vector<1x1xf32>
      %219 = arith.cmpf ogt, %217, %218 : vector<1x1xf32>
      %220 = arith.index_cast %c6_i32 : i32 to index
      %c0_79 = arith.constant 0 : index
      %221 = vector.load %arg2[%220, %c0_79] : memref<32x128xi32, #tpu.memory_space<vmem>>, vector<1x128xi32>
      %c2147483520_i32_80 = arith.constant 2147483520 : i32
      %222 = vector.broadcast %c2147483520_i32_80 : i32 to vector<1x128xi32>
      %223 = arith.andi %221, %222 : vector<1x128xi32>
      %224 = arith.ori %223, %14 : vector<1x128xi32>
      %cst_81 = arith.constant 1.000000e+00 : f32
      %225 = vector.broadcast %cst_81 : f32 to vector<1x128xf32>
      %226 = arith.cmpf ogt, %216, %225 : vector<1x128xf32>
      %227 = arith.andi %16, %226 : vector<1x128xi1>
      %c-1_i32_82 = arith.constant -1 : i32
      %228 = vector.broadcast %c-1_i32_82 : i32 to vector<1x128xi32>
      %229 = arith.select %227, %224, %228 : vector<1x128xi1>, vector<1x128xi32>
      %cst_83 = arith.constant dense<-2147483648> : vector<1xi32>
      %230 = vector.multi_reduction <maxsi>, %229, %cst_83 [1] : vector<1x128xi32> to vector<1xi32>
      %231 = vector.shape_cast %230 : vector<1xi32> to vector<1x1xi32>
      %232 = vector.broadcast %231 : vector<1x1xi32> to vector<1x128xi32>
      %233 = arith.cmpi eq, %229, %232 : vector<1x128xi32>
      %234 = arith.andi %227, %233 : vector<1x128xi1>
      %235 = vector.broadcast %219 : vector<1x1xi1> to vector<1x128xi1>
      %236 = arith.andi %234, %235 : vector<1x128xi1>
      %cst_84 = arith.constant 1.000000e+00 : f32
      %237 = vector.broadcast %cst_84 : f32 to vector<1x128xf32>
      %238 = arith.subf %216, %237 : vector<1x128xf32>
      %cst_85 = arith.constant 1.000000e+00 : f32
      %239 = vector.broadcast %cst_85 : f32 to vector<1x128xf32>
      %240 = arith.minimumf %239, %238 : vector<1x128xf32>
      %cst_86 = arith.constant 0.000000e+00 : f32
      %241 = vector.broadcast %cst_86 : f32 to vector<1x128xf32>
      %242 = arith.select %236, %240, %241 : vector<1x128xi1>, vector<1x128xf32>
      %cst_87 = arith.constant dense<0.000000e+00> : vector<1xf32>
      %243 = vector.multi_reduction <add>, %242, %cst_87 [1] : vector<1x128xf32> to vector<1xf32>
      %244 = vector.shape_cast %243 : vector<1xf32> to vector<1x1xf32>
      %245 = arith.subf %216, %242 : vector<1x128xf32>
      %246 = arith.subf %217, %244 : vector<1x1xf32>
      %c7_i32 = arith.constant 7 : i32
      %cst_88 = arith.constant 1.000000e+01 : f32
      %247 = vector.broadcast %cst_88 : f32 to vector<1x1xf32>
      %248 = arith.cmpf ogt, %246, %247 : vector<1x1xf32>
      %249 = arith.index_cast %c7_i32 : i32 to index
      %c0_89 = arith.constant 0 : index
      %250 = vector.load %arg2[%249, %c0_89] : memref<32x128xi32, #tpu.memory_space<vmem>>, vector<1x128xi32>
      %c2147483520_i32_90 = arith.constant 2147483520 : i32
      %251 = vector.broadcast %c2147483520_i32_90 : i32 to vector<1x128xi32>
      %252 = arith.andi %250, %251 : vector<1x128xi32>
      %253 = arith.ori %252, %14 : vector<1x128xi32>
      %cst_91 = arith.constant 1.000000e+00 : f32
      %254 = vector.broadcast %cst_91 : f32 to vector<1x128xf32>
      %255 = arith.cmpf ogt, %245, %254 : vector<1x128xf32>
      %256 = arith.andi %16, %255 : vector<1x128xi1>
      %c-1_i32_92 = arith.constant -1 : i32
      %257 = vector.broadcast %c-1_i32_92 : i32 to vector<1x128xi32>
      %258 = arith.select %256, %253, %257 : vector<1x128xi1>, vector<1x128xi32>
      %cst_93 = arith.constant dense<-2147483648> : vector<1xi32>
      %259 = vector.multi_reduction <maxsi>, %258, %cst_93 [1] : vector<1x128xi32> to vector<1xi32>
      %260 = vector.shape_cast %259 : vector<1xi32> to vector<1x1xi32>
      %261 = vector.broadcast %260 : vector<1x1xi32> to vector<1x128xi32>
      %262 = arith.cmpi eq, %258, %261 : vector<1x128xi32>
      %263 = arith.andi %256, %262 : vector<1x128xi1>
      %264 = vector.broadcast %248 : vector<1x1xi1> to vector<1x128xi1>
      %265 = arith.andi %263, %264 : vector<1x128xi1>
      %cst_94 = arith.constant 1.000000e+00 : f32
      %266 = vector.broadcast %cst_94 : f32 to vector<1x128xf32>
      %267 = arith.subf %245, %266 : vector<1x128xf32>
      %cst_95 = arith.constant 1.000000e+00 : f32
      %268 = vector.broadcast %cst_95 : f32 to vector<1x128xf32>
      %269 = arith.minimumf %268, %267 : vector<1x128xf32>
      %cst_96 = arith.constant 0.000000e+00 : f32
      %270 = vector.broadcast %cst_96 : f32 to vector<1x128xf32>
      %271 = arith.select %265, %269, %270 : vector<1x128xi1>, vector<1x128xf32>
      %cst_97 = arith.constant dense<0.000000e+00> : vector<1xf32>
      %272 = vector.multi_reduction <add>, %271, %cst_97 [1] : vector<1x128xf32> to vector<1xf32>
      %273 = vector.shape_cast %272 : vector<1xf32> to vector<1x1xf32>
      %274 = arith.subf %245, %271 : vector<1x128xf32>
      %275 = arith.subf %246, %273 : vector<1x1xf32>
      %c8_i32 = arith.constant 8 : i32
      %cst_98 = arith.constant 1.000000e+01 : f32
      %276 = vector.broadcast %cst_98 : f32 to vector<1x1xf32>
      %277 = arith.cmpf ogt, %275, %276 : vector<1x1xf32>
      %278 = arith.index_cast %c8_i32 : i32 to index
      %c0_99 = arith.constant 0 : index
      %279 = vector.load %arg2[%278, %c0_99] : memref<32x128xi32, #tpu.memory_space<vmem>>, vector<1x128xi32>
      %c2147483520_i32_100 = arith.constant 2147483520 : i32
      %280 = vector.broadcast %c2147483520_i32_100 : i32 to vector<1x128xi32>
      %281 = arith.andi %279, %280 : vector<1x128xi32>
      %282 = arith.ori %281, %14 : vector<1x128xi32>
      %cst_101 = arith.constant 1.000000e+00 : f32
      %283 = vector.broadcast %cst_101 : f32 to vector<1x128xf32>
      %284 = arith.cmpf ogt, %274, %283 : vector<1x128xf32>
      %285 = arith.andi %16, %284 : vector<1x128xi1>
      %c-1_i32_102 = arith.constant -1 : i32
      %286 = vector.broadcast %c-1_i32_102 : i32 to vector<1x128xi32>
      %287 = arith.select %285, %282, %286 : vector<1x128xi1>, vector<1x128xi32>
      %cst_103 = arith.constant dense<-2147483648> : vector<1xi32>
      %288 = vector.multi_reduction <maxsi>, %287, %cst_103 [1] : vector<1x128xi32> to vector<1xi32>
      %289 = vector.shape_cast %288 : vector<1xi32> to vector<1x1xi32>
      %290 = vector.broadcast %289 : vector<1x1xi32> to vector<1x128xi32>
      %291 = arith.cmpi eq, %287, %290 : vector<1x128xi32>
      %292 = arith.andi %285, %291 : vector<1x128xi1>
      %293 = vector.broadcast %277 : vector<1x1xi1> to vector<1x128xi1>
      %294 = arith.andi %292, %293 : vector<1x128xi1>
      %cst_104 = arith.constant 1.000000e+00 : f32
      %295 = vector.broadcast %cst_104 : f32 to vector<1x128xf32>
      %296 = arith.subf %274, %295 : vector<1x128xf32>
      %cst_105 = arith.constant 1.000000e+00 : f32
      %297 = vector.broadcast %cst_105 : f32 to vector<1x128xf32>
      %298 = arith.minimumf %297, %296 : vector<1x128xf32>
      %cst_106 = arith.constant 0.000000e+00 : f32
      %299 = vector.broadcast %cst_106 : f32 to vector<1x128xf32>
      %300 = arith.select %294, %298, %299 : vector<1x128xi1>, vector<1x128xf32>
      %cst_107 = arith.constant dense<0.000000e+00> : vector<1xf32>
      %301 = vector.multi_reduction <add>, %300, %cst_107 [1] : vector<1x128xf32> to vector<1xf32>
      %302 = vector.shape_cast %301 : vector<1xf32> to vector<1x1xf32>
      %303 = arith.subf %274, %300 : vector<1x128xf32>
      %304 = arith.subf %275, %302 : vector<1x1xf32>
      %c9_i32 = arith.constant 9 : i32
      %cst_108 = arith.constant 1.000000e+01 : f32
      %305 = vector.broadcast %cst_108 : f32 to vector<1x1xf32>
      %306 = arith.cmpf ogt, %304, %305 : vector<1x1xf32>
      %307 = arith.index_cast %c9_i32 : i32 to index
      %c0_109 = arith.constant 0 : index
      %308 = vector.load %arg2[%307, %c0_109] : memref<32x128xi32, #tpu.memory_space<vmem>>, vector<1x128xi32>
      %c2147483520_i32_110 = arith.constant 2147483520 : i32
      %309 = vector.broadcast %c2147483520_i32_110 : i32 to vector<1x128xi32>
      %310 = arith.andi %308, %309 : vector<1x128xi32>
      %311 = arith.ori %310, %14 : vector<1x128xi32>
      %cst_111 = arith.constant 1.000000e+00 : f32
      %312 = vector.broadcast %cst_111 : f32 to vector<1x128xf32>
      %313 = arith.cmpf ogt, %303, %312 : vector<1x128xf32>
      %314 = arith.andi %16, %313 : vector<1x128xi1>
      %c-1_i32_112 = arith.constant -1 : i32
      %315 = vector.broadcast %c-1_i32_112 : i32 to vector<1x128xi32>
      %316 = arith.select %314, %311, %315 : vector<1x128xi1>, vector<1x128xi32>
      %cst_113 = arith.constant dense<-2147483648> : vector<1xi32>
      %317 = vector.multi_reduction <maxsi>, %316, %cst_113 [1] : vector<1x128xi32> to vector<1xi32>
      %318 = vector.shape_cast %317 : vector<1xi32> to vector<1x1xi32>
      %319 = vector.broadcast %318 : vector<1x1xi32> to vector<1x128xi32>
      %320 = arith.cmpi eq, %316, %319 : vector<1x128xi32>
      %321 = arith.andi %314, %320 : vector<1x128xi1>
      %322 = vector.broadcast %306 : vector<1x1xi1> to vector<1x128xi1>
      %323 = arith.andi %321, %322 : vector<1x128xi1>
      %cst_114 = arith.constant 1.000000e+00 : f32
      %324 = vector.broadcast %cst_114 : f32 to vector<1x128xf32>
      %325 = arith.subf %303, %324 : vector<1x128xf32>
      %cst_115 = arith.constant 1.000000e+00 : f32
      %326 = vector.broadcast %cst_115 : f32 to vector<1x128xf32>
      %327 = arith.minimumf %326, %325 : vector<1x128xf32>
      %cst_116 = arith.constant 0.000000e+00 : f32
      %328 = vector.broadcast %cst_116 : f32 to vector<1x128xf32>
      %329 = arith.select %323, %327, %328 : vector<1x128xi1>, vector<1x128xf32>
      %cst_117 = arith.constant dense<0.000000e+00> : vector<1xf32>
      %330 = vector.multi_reduction <add>, %329, %cst_117 [1] : vector<1x128xf32> to vector<1xf32>
      %331 = vector.shape_cast %330 : vector<1xf32> to vector<1x1xf32>
      %332 = arith.subf %303, %329 : vector<1x128xf32>
      %333 = arith.subf %304, %331 : vector<1x1xf32>
      %c10_i32 = arith.constant 10 : i32
      %cst_118 = arith.constant 1.000000e+01 : f32
      %334 = vector.broadcast %cst_118 : f32 to vector<1x1xf32>
      %335 = arith.cmpf ogt, %333, %334 : vector<1x1xf32>
      %336 = arith.index_cast %c10_i32 : i32 to index
      %c0_119 = arith.constant 0 : index
      %337 = vector.load %arg2[%336, %c0_119] : memref<32x128xi32, #tpu.memory_space<vmem>>, vector<1x128xi32>
      %c2147483520_i32_120 = arith.constant 2147483520 : i32
      %338 = vector.broadcast %c2147483520_i32_120 : i32 to vector<1x128xi32>
      %339 = arith.andi %337, %338 : vector<1x128xi32>
      %340 = arith.ori %339, %14 : vector<1x128xi32>
      %cst_121 = arith.constant 1.000000e+00 : f32
      %341 = vector.broadcast %cst_121 : f32 to vector<1x128xf32>
      %342 = arith.cmpf ogt, %332, %341 : vector<1x128xf32>
      %343 = arith.andi %16, %342 : vector<1x128xi1>
      %c-1_i32_122 = arith.constant -1 : i32
      %344 = vector.broadcast %c-1_i32_122 : i32 to vector<1x128xi32>
      %345 = arith.select %343, %340, %344 : vector<1x128xi1>, vector<1x128xi32>
      %cst_123 = arith.constant dense<-2147483648> : vector<1xi32>
      %346 = vector.multi_reduction <maxsi>, %345, %cst_123 [1] : vector<1x128xi32> to vector<1xi32>
      %347 = vector.shape_cast %346 : vector<1xi32> to vector<1x1xi32>
      %348 = vector.broadcast %347 : vector<1x1xi32> to vector<1x128xi32>
      %349 = arith.cmpi eq, %345, %348 : vector<1x128xi32>
      %350 = arith.andi %343, %349 : vector<1x128xi1>
      %351 = vector.broadcast %335 : vector<1x1xi1> to vector<1x128xi1>
      %352 = arith.andi %350, %351 : vector<1x128xi1>
      %cst_124 = arith.constant 1.000000e+00 : f32
      %353 = vector.broadcast %cst_124 : f32 to vector<1x128xf32>
      %354 = arith.subf %332, %353 : vector<1x128xf32>
      %cst_125 = arith.constant 1.000000e+00 : f32
      %355 = vector.broadcast %cst_125 : f32 to vector<1x128xf32>
      %356 = arith.minimumf %355, %354 : vector<1x128xf32>
      %cst_126 = arith.constant 0.000000e+00 : f32
      %357 = vector.broadcast %cst_126 : f32 to vector<1x128xf32>
      %358 = arith.select %352, %356, %357 : vector<1x128xi1>, vector<1x128xf32>
      %cst_127 = arith.constant dense<0.000000e+00> : vector<1xf32>
      %359 = vector.multi_reduction <add>, %358, %cst_127 [1] : vector<1x128xf32> to vector<1xf32>
      %360 = vector.shape_cast %359 : vector<1xf32> to vector<1x1xf32>
      %361 = arith.subf %332, %358 : vector<1x128xf32>
      %362 = arith.subf %333, %360 : vector<1x1xf32>
      %c11_i32 = arith.constant 11 : i32
      %cst_128 = arith.constant 1.000000e+01 : f32
      %363 = vector.broadcast %cst_128 : f32 to vector<1x1xf32>
      %364 = arith.cmpf ogt, %362, %363 : vector<1x1xf32>
      %365 = arith.index_cast %c11_i32 : i32 to index
      %c0_129 = arith.constant 0 : index
      %366 = vector.load %arg2[%365, %c0_129] : memref<32x128xi32, #tpu.memory_space<vmem>>, vector<1x128xi32>
      %c2147483520_i32_130 = arith.constant 2147483520 : i32
      %367 = vector.broadcast %c2147483520_i32_130 : i32 to vector<1x128xi32>
      %368 = arith.andi %366, %367 : vector<1x128xi32>
      %369 = arith.ori %368, %14 : vector<1x128xi32>
      %cst_131 = arith.constant 1.000000e+00 : f32
      %370 = vector.broadcast %cst_131 : f32 to vector<1x128xf32>
      %371 = arith.cmpf ogt, %361, %370 : vector<1x128xf32>
      %372 = arith.andi %16, %371 : vector<1x128xi1>
      %c-1_i32_132 = arith.constant -1 : i32
      %373 = vector.broadcast %c-1_i32_132 : i32 to vector<1x128xi32>
      %374 = arith.select %372, %369, %373 : vector<1x128xi1>, vector<1x128xi32>
      %cst_133 = arith.constant dense<-2147483648> : vector<1xi32>
      %375 = vector.multi_reduction <maxsi>, %374, %cst_133 [1] : vector<1x128xi32> to vector<1xi32>
      %376 = vector.shape_cast %375 : vector<1xi32> to vector<1x1xi32>
      %377 = vector.broadcast %376 : vector<1x1xi32> to vector<1x128xi32>
      %378 = arith.cmpi eq, %374, %377 : vector<1x128xi32>
      %379 = arith.andi %372, %378 : vector<1x128xi1>
      %380 = vector.broadcast %364 : vector<1x1xi1> to vector<1x128xi1>
      %381 = arith.andi %379, %380 : vector<1x128xi1>
      %cst_134 = arith.constant 1.000000e+00 : f32
      %382 = vector.broadcast %cst_134 : f32 to vector<1x128xf32>
      %383 = arith.subf %361, %382 : vector<1x128xf32>
      %cst_135 = arith.constant 1.000000e+00 : f32
      %384 = vector.broadcast %cst_135 : f32 to vector<1x128xf32>
      %385 = arith.minimumf %384, %383 : vector<1x128xf32>
      %cst_136 = arith.constant 0.000000e+00 : f32
      %386 = vector.broadcast %cst_136 : f32 to vector<1x128xf32>
      %387 = arith.select %381, %385, %386 : vector<1x128xi1>, vector<1x128xf32>
      %cst_137 = arith.constant dense<0.000000e+00> : vector<1xf32>
      %388 = vector.multi_reduction <add>, %387, %cst_137 [1] : vector<1x128xf32> to vector<1xf32>
      %389 = vector.shape_cast %388 : vector<1xf32> to vector<1x1xf32>
      %390 = arith.subf %361, %387 : vector<1x128xf32>
      %391 = arith.subf %362, %389 : vector<1x1xf32>
      %c12_i32 = arith.constant 12 : i32
      %cst_138 = arith.constant 1.000000e+01 : f32
      %392 = vector.broadcast %cst_138 : f32 to vector<1x1xf32>
      %393 = arith.cmpf ogt, %391, %392 : vector<1x1xf32>
      %394 = arith.index_cast %c12_i32 : i32 to index
      %c0_139 = arith.constant 0 : index
      %395 = vector.load %arg2[%394, %c0_139] : memref<32x128xi32, #tpu.memory_space<vmem>>, vector<1x128xi32>
      %c2147483520_i32_140 = arith.constant 2147483520 : i32
      %396 = vector.broadcast %c2147483520_i32_140 : i32 to vector<1x128xi32>
      %397 = arith.andi %395, %396 : vector<1x128xi32>
      %398 = arith.ori %397, %14 : vector<1x128xi32>
      %cst_141 = arith.constant 1.000000e+00 : f32
      %399 = vector.broadcast %cst_141 : f32 to vector<1x128xf32>
      %400 = arith.cmpf ogt, %390, %399 : vector<1x128xf32>
      %401 = arith.andi %16, %400 : vector<1x128xi1>
      %c-1_i32_142 = arith.constant -1 : i32
      %402 = vector.broadcast %c-1_i32_142 : i32 to vector<1x128xi32>
      %403 = arith.select %401, %398, %402 : vector<1x128xi1>, vector<1x128xi32>
      %cst_143 = arith.constant dense<-2147483648> : vector<1xi32>
      %404 = vector.multi_reduction <maxsi>, %403, %cst_143 [1] : vector<1x128xi32> to vector<1xi32>
      %405 = vector.shape_cast %404 : vector<1xi32> to vector<1x1xi32>
      %406 = vector.broadcast %405 : vector<1x1xi32> to vector<1x128xi32>
      %407 = arith.cmpi eq, %403, %406 : vector<1x128xi32>
      %408 = arith.andi %401, %407 : vector<1x128xi1>
      %409 = vector.broadcast %393 : vector<1x1xi1> to vector<1x128xi1>
      %410 = arith.andi %408, %409 : vector<1x128xi1>
      %cst_144 = arith.constant 1.000000e+00 : f32
      %411 = vector.broadcast %cst_144 : f32 to vector<1x128xf32>
      %412 = arith.subf %390, %411 : vector<1x128xf32>
      %cst_145 = arith.constant 1.000000e+00 : f32
      %413 = vector.broadcast %cst_145 : f32 to vector<1x128xf32>
      %414 = arith.minimumf %413, %412 : vector<1x128xf32>
      %cst_146 = arith.constant 0.000000e+00 : f32
      %415 = vector.broadcast %cst_146 : f32 to vector<1x128xf32>
      %416 = arith.select %410, %414, %415 : vector<1x128xi1>, vector<1x128xf32>
      %cst_147 = arith.constant dense<0.000000e+00> : vector<1xf32>
      %417 = vector.multi_reduction <add>, %416, %cst_147 [1] : vector<1x128xf32> to vector<1xf32>
      %418 = vector.shape_cast %417 : vector<1xf32> to vector<1x1xf32>
      %419 = arith.subf %390, %416 : vector<1x128xf32>
      %420 = arith.subf %391, %418 : vector<1x1xf32>
      %c13_i32 = arith.constant 13 : i32
      %cst_148 = arith.constant 1.000000e+01 : f32
      %421 = vector.broadcast %cst_148 : f32 to vector<1x1xf32>
      %422 = arith.cmpf ogt, %420, %421 : vector<1x1xf32>
      %423 = arith.index_cast %c13_i32 : i32 to index
      %c0_149 = arith.constant 0 : index
      %424 = vector.load %arg2[%423, %c0_149] : memref<32x128xi32, #tpu.memory_space<vmem>>, vector<1x128xi32>
      %c2147483520_i32_150 = arith.constant 2147483520 : i32
      %425 = vector.broadcast %c2147483520_i32_150 : i32 to vector<1x128xi32>
      %426 = arith.andi %424, %425 : vector<1x128xi32>
      %427 = arith.ori %426, %14 : vector<1x128xi32>
      %cst_151 = arith.constant 1.000000e+00 : f32
      %428 = vector.broadcast %cst_151 : f32 to vector<1x128xf32>
      %429 = arith.cmpf ogt, %419, %428 : vector<1x128xf32>
      %430 = arith.andi %16, %429 : vector<1x128xi1>
      %c-1_i32_152 = arith.constant -1 : i32
      %431 = vector.broadcast %c-1_i32_152 : i32 to vector<1x128xi32>
      %432 = arith.select %430, %427, %431 : vector<1x128xi1>, vector<1x128xi32>
      %cst_153 = arith.constant dense<-2147483648> : vector<1xi32>
      %433 = vector.multi_reduction <maxsi>, %432, %cst_153 [1] : vector<1x128xi32> to vector<1xi32>
      %434 = vector.shape_cast %433 : vector<1xi32> to vector<1x1xi32>
      %435 = vector.broadcast %434 : vector<1x1xi32> to vector<1x128xi32>
      %436 = arith.cmpi eq, %432, %435 : vector<1x128xi32>
      %437 = arith.andi %430, %436 : vector<1x128xi1>
      %438 = vector.broadcast %422 : vector<1x1xi1> to vector<1x128xi1>
      %439 = arith.andi %437, %438 : vector<1x128xi1>
      %cst_154 = arith.constant 1.000000e+00 : f32
      %440 = vector.broadcast %cst_154 : f32 to vector<1x128xf32>
      %441 = arith.subf %419, %440 : vector<1x128xf32>
      %cst_155 = arith.constant 1.000000e+00 : f32
      %442 = vector.broadcast %cst_155 : f32 to vector<1x128xf32>
      %443 = arith.minimumf %442, %441 : vector<1x128xf32>
      %cst_156 = arith.constant 0.000000e+00 : f32
      %444 = vector.broadcast %cst_156 : f32 to vector<1x128xf32>
      %445 = arith.select %439, %443, %444 : vector<1x128xi1>, vector<1x128xf32>
      %cst_157 = arith.constant dense<0.000000e+00> : vector<1xf32>
      %446 = vector.multi_reduction <add>, %445, %cst_157 [1] : vector<1x128xf32> to vector<1xf32>
      %447 = vector.shape_cast %446 : vector<1xf32> to vector<1x1xf32>
      %448 = arith.subf %419, %445 : vector<1x128xf32>
      %449 = arith.subf %420, %447 : vector<1x1xf32>
      %c14_i32 = arith.constant 14 : i32
      %cst_158 = arith.constant 1.000000e+01 : f32
      %450 = vector.broadcast %cst_158 : f32 to vector<1x1xf32>
      %451 = arith.cmpf ogt, %449, %450 : vector<1x1xf32>
      %452 = arith.index_cast %c14_i32 : i32 to index
      %c0_159 = arith.constant 0 : index
      %453 = vector.load %arg2[%452, %c0_159] : memref<32x128xi32, #tpu.memory_space<vmem>>, vector<1x128xi32>
      %c2147483520_i32_160 = arith.constant 2147483520 : i32
      %454 = vector.broadcast %c2147483520_i32_160 : i32 to vector<1x128xi32>
      %455 = arith.andi %453, %454 : vector<1x128xi32>
      %456 = arith.ori %455, %14 : vector<1x128xi32>
      %cst_161 = arith.constant 1.000000e+00 : f32
      %457 = vector.broadcast %cst_161 : f32 to vector<1x128xf32>
      %458 = arith.cmpf ogt, %448, %457 : vector<1x128xf32>
      %459 = arith.andi %16, %458 : vector<1x128xi1>
      %c-1_i32_162 = arith.constant -1 : i32
      %460 = vector.broadcast %c-1_i32_162 : i32 to vector<1x128xi32>
      %461 = arith.select %459, %456, %460 : vector<1x128xi1>, vector<1x128xi32>
      %cst_163 = arith.constant dense<-2147483648> : vector<1xi32>
      %462 = vector.multi_reduction <maxsi>, %461, %cst_163 [1] : vector<1x128xi32> to vector<1xi32>
      %463 = vector.shape_cast %462 : vector<1xi32> to vector<1x1xi32>
      %464 = vector.broadcast %463 : vector<1x1xi32> to vector<1x128xi32>
      %465 = arith.cmpi eq, %461, %464 : vector<1x128xi32>
      %466 = arith.andi %459, %465 : vector<1x128xi1>
      %467 = vector.broadcast %451 : vector<1x1xi1> to vector<1x128xi1>
      %468 = arith.andi %466, %467 : vector<1x128xi1>
      %cst_164 = arith.constant 1.000000e+00 : f32
      %469 = vector.broadcast %cst_164 : f32 to vector<1x128xf32>
      %470 = arith.subf %448, %469 : vector<1x128xf32>
      %cst_165 = arith.constant 1.000000e+00 : f32
      %471 = vector.broadcast %cst_165 : f32 to vector<1x128xf32>
      %472 = arith.minimumf %471, %470 : vector<1x128xf32>
      %cst_166 = arith.constant 0.000000e+00 : f32
      %473 = vector.broadcast %cst_166 : f32 to vector<1x128xf32>
      %474 = arith.select %468, %472, %473 : vector<1x128xi1>, vector<1x128xf32>
      %cst_167 = arith.constant dense<0.000000e+00> : vector<1xf32>
      %475 = vector.multi_reduction <add>, %474, %cst_167 [1] : vector<1x128xf32> to vector<1xf32>
      %476 = vector.shape_cast %475 : vector<1xf32> to vector<1x1xf32>
      %477 = arith.subf %448, %474 : vector<1x128xf32>
      %478 = arith.subf %449, %476 : vector<1x1xf32>
      %c15_i32 = arith.constant 15 : i32
      %cst_168 = arith.constant 1.000000e+01 : f32
      %479 = vector.broadcast %cst_168 : f32 to vector<1x1xf32>
      %480 = arith.cmpf ogt, %478, %479 : vector<1x1xf32>
      %481 = arith.index_cast %c15_i32 : i32 to index
      %c0_169 = arith.constant 0 : index
      %482 = vector.load %arg2[%481, %c0_169] : memref<32x128xi32, #tpu.memory_space<vmem>>, vector<1x128xi32>
      %c2147483520_i32_170 = arith.constant 2147483520 : i32
      %483 = vector.broadcast %c2147483520_i32_170 : i32 to vector<1x128xi32>
      %484 = arith.andi %482, %483 : vector<1x128xi32>
      %485 = arith.ori %484, %14 : vector<1x128xi32>
      %cst_171 = arith.constant 1.000000e+00 : f32
      %486 = vector.broadcast %cst_171 : f32 to vector<1x128xf32>
      %487 = arith.cmpf ogt, %477, %486 : vector<1x128xf32>
      %488 = arith.andi %16, %487 : vector<1x128xi1>
      %c-1_i32_172 = arith.constant -1 : i32
      %489 = vector.broadcast %c-1_i32_172 : i32 to vector<1x128xi32>
      %490 = arith.select %488, %485, %489 : vector<1x128xi1>, vector<1x128xi32>
      %cst_173 = arith.constant dense<-2147483648> : vector<1xi32>
      %491 = vector.multi_reduction <maxsi>, %490, %cst_173 [1] : vector<1x128xi32> to vector<1xi32>
      %492 = vector.shape_cast %491 : vector<1xi32> to vector<1x1xi32>
      %493 = vector.broadcast %492 : vector<1x1xi32> to vector<1x128xi32>
      %494 = arith.cmpi eq, %490, %493 : vector<1x128xi32>
      %495 = arith.andi %488, %494 : vector<1x128xi1>
      %496 = vector.broadcast %480 : vector<1x1xi1> to vector<1x128xi1>
      %497 = arith.andi %495, %496 : vector<1x128xi1>
      %cst_174 = arith.constant 1.000000e+00 : f32
      %498 = vector.broadcast %cst_174 : f32 to vector<1x128xf32>
      %499 = arith.subf %477, %498 : vector<1x128xf32>
      %cst_175 = arith.constant 1.000000e+00 : f32
      %500 = vector.broadcast %cst_175 : f32 to vector<1x128xf32>
      %501 = arith.minimumf %500, %499 : vector<1x128xf32>
      %cst_176 = arith.constant 0.000000e+00 : f32
      %502 = vector.broadcast %cst_176 : f32 to vector<1x128xf32>
      %503 = arith.select %497, %501, %502 : vector<1x128xi1>, vector<1x128xf32>
      %cst_177 = arith.constant dense<0.000000e+00> : vector<1xf32>
      %504 = vector.multi_reduction <add>, %503, %cst_177 [1] : vector<1x128xf32> to vector<1xf32>
      %505 = vector.shape_cast %504 : vector<1xf32> to vector<1x1xf32>
      %506 = arith.subf %477, %503 : vector<1x128xf32>
      %507 = arith.subf %478, %505 : vector<1x1xf32>
      %c16_i32 = arith.constant 16 : i32
      %cst_178 = arith.constant 1.000000e+01 : f32
      %508 = vector.broadcast %cst_178 : f32 to vector<1x1xf32>
      %509 = arith.cmpf ogt, %507, %508 : vector<1x1xf32>
      %510 = arith.index_cast %c16_i32 : i32 to index
      %c0_179 = arith.constant 0 : index
      %511 = vector.load %arg2[%510, %c0_179] : memref<32x128xi32, #tpu.memory_space<vmem>>, vector<1x128xi32>
      %c2147483520_i32_180 = arith.constant 2147483520 : i32
      %512 = vector.broadcast %c2147483520_i32_180 : i32 to vector<1x128xi32>
      %513 = arith.andi %511, %512 : vector<1x128xi32>
      %514 = arith.ori %513, %14 : vector<1x128xi32>
      %cst_181 = arith.constant 1.000000e+00 : f32
      %515 = vector.broadcast %cst_181 : f32 to vector<1x128xf32>
      %516 = arith.cmpf ogt, %506, %515 : vector<1x128xf32>
      %517 = arith.andi %16, %516 : vector<1x128xi1>
      %c-1_i32_182 = arith.constant -1 : i32
      %518 = vector.broadcast %c-1_i32_182 : i32 to vector<1x128xi32>
      %519 = arith.select %517, %514, %518 : vector<1x128xi1>, vector<1x128xi32>
      %cst_183 = arith.constant dense<-2147483648> : vector<1xi32>
      %520 = vector.multi_reduction <maxsi>, %519, %cst_183 [1] : vector<1x128xi32> to vector<1xi32>
      %521 = vector.shape_cast %520 : vector<1xi32> to vector<1x1xi32>
      %522 = vector.broadcast %521 : vector<1x1xi32> to vector<1x128xi32>
      %523 = arith.cmpi eq, %519, %522 : vector<1x128xi32>
      %524 = arith.andi %517, %523 : vector<1x128xi1>
      %525 = vector.broadcast %509 : vector<1x1xi1> to vector<1x128xi1>
      %526 = arith.andi %524, %525 : vector<1x128xi1>
      %cst_184 = arith.constant 1.000000e+00 : f32
      %527 = vector.broadcast %cst_184 : f32 to vector<1x128xf32>
      %528 = arith.subf %506, %527 : vector<1x128xf32>
      %cst_185 = arith.constant 1.000000e+00 : f32
      %529 = vector.broadcast %cst_185 : f32 to vector<1x128xf32>
      %530 = arith.minimumf %529, %528 : vector<1x128xf32>
      %cst_186 = arith.constant 0.000000e+00 : f32
      %531 = vector.broadcast %cst_186 : f32 to vector<1x128xf32>
      %532 = arith.select %526, %530, %531 : vector<1x128xi1>, vector<1x128xf32>
      %cst_187 = arith.constant dense<0.000000e+00> : vector<1xf32>
      %533 = vector.multi_reduction <add>, %532, %cst_187 [1] : vector<1x128xf32> to vector<1xf32>
      %534 = vector.shape_cast %533 : vector<1xf32> to vector<1x1xf32>
      %535 = arith.subf %506, %532 : vector<1x128xf32>
      %536 = arith.subf %507, %534 : vector<1x1xf32>
      %c17_i32 = arith.constant 17 : i32
      %cst_188 = arith.constant 1.000000e+01 : f32
      %537 = vector.broadcast %cst_188 : f32 to vector<1x1xf32>
      %538 = arith.cmpf ogt, %536, %537 : vector<1x1xf32>
      %539 = arith.index_cast %c17_i32 : i32 to index
      %c0_189 = arith.constant 0 : index
      %540 = vector.load %arg2[%539, %c0_189] : memref<32x128xi32, #tpu.memory_space<vmem>>, vector<1x128xi32>
      %c2147483520_i32_190 = arith.constant 2147483520 : i32
      %541 = vector.broadcast %c2147483520_i32_190 : i32 to vector<1x128xi32>
      %542 = arith.andi %540, %541 : vector<1x128xi32>
      %543 = arith.ori %542, %14 : vector<1x128xi32>
      %cst_191 = arith.constant 1.000000e+00 : f32
      %544 = vector.broadcast %cst_191 : f32 to vector<1x128xf32>
      %545 = arith.cmpf ogt, %535, %544 : vector<1x128xf32>
      %546 = arith.andi %16, %545 : vector<1x128xi1>
      %c-1_i32_192 = arith.constant -1 : i32
      %547 = vector.broadcast %c-1_i32_192 : i32 to vector<1x128xi32>
      %548 = arith.select %546, %543, %547 : vector<1x128xi1>, vector<1x128xi32>
      %cst_193 = arith.constant dense<-2147483648> : vector<1xi32>
      %549 = vector.multi_reduction <maxsi>, %548, %cst_193 [1] : vector<1x128xi32> to vector<1xi32>
      %550 = vector.shape_cast %549 : vector<1xi32> to vector<1x1xi32>
      %551 = vector.broadcast %550 : vector<1x1xi32> to vector<1x128xi32>
      %552 = arith.cmpi eq, %548, %551 : vector<1x128xi32>
      %553 = arith.andi %546, %552 : vector<1x128xi1>
      %554 = vector.broadcast %538 : vector<1x1xi1> to vector<1x128xi1>
      %555 = arith.andi %553, %554 : vector<1x128xi1>
      %cst_194 = arith.constant 1.000000e+00 : f32
      %556 = vector.broadcast %cst_194 : f32 to vector<1x128xf32>
      %557 = arith.subf %535, %556 : vector<1x128xf32>
      %cst_195 = arith.constant 1.000000e+00 : f32
      %558 = vector.broadcast %cst_195 : f32 to vector<1x128xf32>
      %559 = arith.minimumf %558, %557 : vector<1x128xf32>
      %cst_196 = arith.constant 0.000000e+00 : f32
      %560 = vector.broadcast %cst_196 : f32 to vector<1x128xf32>
      %561 = arith.select %555, %559, %560 : vector<1x128xi1>, vector<1x128xf32>
      %cst_197 = arith.constant dense<0.000000e+00> : vector<1xf32>
      %562 = vector.multi_reduction <add>, %561, %cst_197 [1] : vector<1x128xf32> to vector<1xf32>
      %563 = vector.shape_cast %562 : vector<1xf32> to vector<1x1xf32>
      %564 = arith.subf %535, %561 : vector<1x128xf32>
      %565 = arith.subf %536, %563 : vector<1x1xf32>
      %c18_i32 = arith.constant 18 : i32
      %cst_198 = arith.constant 1.000000e+01 : f32
      %566 = vector.broadcast %cst_198 : f32 to vector<1x1xf32>
      %567 = arith.cmpf ogt, %565, %566 : vector<1x1xf32>
      %568 = arith.index_cast %c18_i32 : i32 to index
      %c0_199 = arith.constant 0 : index
      %569 = vector.load %arg2[%568, %c0_199] : memref<32x128xi32, #tpu.memory_space<vmem>>, vector<1x128xi32>
      %c2147483520_i32_200 = arith.constant 2147483520 : i32
      %570 = vector.broadcast %c2147483520_i32_200 : i32 to vector<1x128xi32>
      %571 = arith.andi %569, %570 : vector<1x128xi32>
      %572 = arith.ori %571, %14 : vector<1x128xi32>
      %cst_201 = arith.constant 1.000000e+00 : f32
      %573 = vector.broadcast %cst_201 : f32 to vector<1x128xf32>
      %574 = arith.cmpf ogt, %564, %573 : vector<1x128xf32>
      %575 = arith.andi %16, %574 : vector<1x128xi1>
      %c-1_i32_202 = arith.constant -1 : i32
      %576 = vector.broadcast %c-1_i32_202 : i32 to vector<1x128xi32>
      %577 = arith.select %575, %572, %576 : vector<1x128xi1>, vector<1x128xi32>
      %cst_203 = arith.constant dense<-2147483648> : vector<1xi32>
      %578 = vector.multi_reduction <maxsi>, %577, %cst_203 [1] : vector<1x128xi32> to vector<1xi32>
      %579 = vector.shape_cast %578 : vector<1xi32> to vector<1x1xi32>
      %580 = vector.broadcast %579 : vector<1x1xi32> to vector<1x128xi32>
      %581 = arith.cmpi eq, %577, %580 : vector<1x128xi32>
      %582 = arith.andi %575, %581 : vector<1x128xi1>
      %583 = vector.broadcast %567 : vector<1x1xi1> to vector<1x128xi1>
      %584 = arith.andi %582, %583 : vector<1x128xi1>
      %cst_204 = arith.constant 1.000000e+00 : f32
      %585 = vector.broadcast %cst_204 : f32 to vector<1x128xf32>
      %586 = arith.subf %564, %585 : vector<1x128xf32>
      %cst_205 = arith.constant 1.000000e+00 : f32
      %587 = vector.broadcast %cst_205 : f32 to vector<1x128xf32>
      %588 = arith.minimumf %587, %586 : vector<1x128xf32>
      %cst_206 = arith.constant 0.000000e+00 : f32
      %589 = vector.broadcast %cst_206 : f32 to vector<1x128xf32>
      %590 = arith.select %584, %588, %589 : vector<1x128xi1>, vector<1x128xf32>
      %cst_207 = arith.constant dense<0.000000e+00> : vector<1xf32>
      %591 = vector.multi_reduction <add>, %590, %cst_207 [1] : vector<1x128xf32> to vector<1xf32>
      %592 = vector.shape_cast %591 : vector<1xf32> to vector<1x1xf32>
      %593 = arith.subf %564, %590 : vector<1x128xf32>
      %594 = arith.subf %565, %592 : vector<1x1xf32>
      %c19_i32 = arith.constant 19 : i32
      %cst_208 = arith.constant 1.000000e+01 : f32
      %595 = vector.broadcast %cst_208 : f32 to vector<1x1xf32>
      %596 = arith.cmpf ogt, %594, %595 : vector<1x1xf32>
      %597 = arith.index_cast %c19_i32 : i32 to index
      %c0_209 = arith.constant 0 : index
      %598 = vector.load %arg2[%597, %c0_209] : memref<32x128xi32, #tpu.memory_space<vmem>>, vector<1x128xi32>
      %c2147483520_i32_210 = arith.constant 2147483520 : i32
      %599 = vector.broadcast %c2147483520_i32_210 : i32 to vector<1x128xi32>
      %600 = arith.andi %598, %599 : vector<1x128xi32>
      %601 = arith.ori %600, %14 : vector<1x128xi32>
      %cst_211 = arith.constant 1.000000e+00 : f32
      %602 = vector.broadcast %cst_211 : f32 to vector<1x128xf32>
      %603 = arith.cmpf ogt, %593, %602 : vector<1x128xf32>
      %604 = arith.andi %16, %603 : vector<1x128xi1>
      %c-1_i32_212 = arith.constant -1 : i32
      %605 = vector.broadcast %c-1_i32_212 : i32 to vector<1x128xi32>
      %606 = arith.select %604, %601, %605 : vector<1x128xi1>, vector<1x128xi32>
      %cst_213 = arith.constant dense<-2147483648> : vector<1xi32>
      %607 = vector.multi_reduction <maxsi>, %606, %cst_213 [1] : vector<1x128xi32> to vector<1xi32>
      %608 = vector.shape_cast %607 : vector<1xi32> to vector<1x1xi32>
      %609 = vector.broadcast %608 : vector<1x1xi32> to vector<1x128xi32>
      %610 = arith.cmpi eq, %606, %609 : vector<1x128xi32>
      %611 = arith.andi %604, %610 : vector<1x128xi1>
      %612 = vector.broadcast %596 : vector<1x1xi1> to vector<1x128xi1>
      %613 = arith.andi %611, %612 : vector<1x128xi1>
      %cst_214 = arith.constant 1.000000e+00 : f32
      %614 = vector.broadcast %cst_214 : f32 to vector<1x128xf32>
      %615 = arith.subf %593, %614 : vector<1x128xf32>
      %cst_215 = arith.constant 1.000000e+00 : f32
      %616 = vector.broadcast %cst_215 : f32 to vector<1x128xf32>
      %617 = arith.minimumf %616, %615 : vector<1x128xf32>
      %cst_216 = arith.constant 0.000000e+00 : f32
      %618 = vector.broadcast %cst_216 : f32 to vector<1x128xf32>
      %619 = arith.select %613, %617, %618 : vector<1x128xi1>, vector<1x128xf32>
      %cst_217 = arith.constant dense<0.000000e+00> : vector<1xf32>
      %620 = vector.multi_reduction <add>, %619, %cst_217 [1] : vector<1x128xf32> to vector<1xf32>
      %621 = vector.shape_cast %620 : vector<1xf32> to vector<1x1xf32>
      %622 = arith.subf %593, %619 : vector<1x128xf32>
      %623 = arith.subf %594, %621 : vector<1x1xf32>
      %c20_i32 = arith.constant 20 : i32
      %cst_218 = arith.constant 1.000000e+01 : f32
      %624 = vector.broadcast %cst_218 : f32 to vector<1x1xf32>
      %625 = arith.cmpf ogt, %623, %624 : vector<1x1xf32>
      %626 = arith.index_cast %c20_i32 : i32 to index
      %c0_219 = arith.constant 0 : index
      %627 = vector.load %arg2[%626, %c0_219] : memref<32x128xi32, #tpu.memory_space<vmem>>, vector<1x128xi32>
      %c2147483520_i32_220 = arith.constant 2147483520 : i32
      %628 = vector.broadcast %c2147483520_i32_220 : i32 to vector<1x128xi32>
      %629 = arith.andi %627, %628 : vector<1x128xi32>
      %630 = arith.ori %629, %14 : vector<1x128xi32>
      %cst_221 = arith.constant 1.000000e+00 : f32
      %631 = vector.broadcast %cst_221 : f32 to vector<1x128xf32>
      %632 = arith.cmpf ogt, %622, %631 : vector<1x128xf32>
      %633 = arith.andi %16, %632 : vector<1x128xi1>
      %c-1_i32_222 = arith.constant -1 : i32
      %634 = vector.broadcast %c-1_i32_222 : i32 to vector<1x128xi32>
      %635 = arith.select %633, %630, %634 : vector<1x128xi1>, vector<1x128xi32>
      %cst_223 = arith.constant dense<-2147483648> : vector<1xi32>
      %636 = vector.multi_reduction <maxsi>, %635, %cst_223 [1] : vector<1x128xi32> to vector<1xi32>
      %637 = vector.shape_cast %636 : vector<1xi32> to vector<1x1xi32>
      %638 = vector.broadcast %637 : vector<1x1xi32> to vector<1x128xi32>
      %639 = arith.cmpi eq, %635, %638 : vector<1x128xi32>
      %640 = arith.andi %633, %639 : vector<1x128xi1>
      %641 = vector.broadcast %625 : vector<1x1xi1> to vector<1x128xi1>
      %642 = arith.andi %640, %641 : vector<1x128xi1>
      %cst_224 = arith.constant 1.000000e+00 : f32
      %643 = vector.broadcast %cst_224 : f32 to vector<1x128xf32>
      %644 = arith.subf %622, %643 : vector<1x128xf32>
      %cst_225 = arith.constant 1.000000e+00 : f32
      %645 = vector.broadcast %cst_225 : f32 to vector<1x128xf32>
      %646 = arith.minimumf %645, %644 : vector<1x128xf32>
      %cst_226 = arith.constant 0.000000e+00 : f32
      %647 = vector.broadcast %cst_226 : f32 to vector<1x128xf32>
      %648 = arith.select %642, %646, %647 : vector<1x128xi1>, vector<1x128xf32>
      %cst_227 = arith.constant dense<0.000000e+00> : vector<1xf32>
      %649 = vector.multi_reduction <add>, %648, %cst_227 [1] : vector<1x128xf32> to vector<1xf32>
      %650 = vector.shape_cast %649 : vector<1xf32> to vector<1x1xf32>
      %651 = arith.subf %622, %648 : vector<1x128xf32>
      %652 = arith.subf %623, %650 : vector<1x1xf32>
      %c21_i32 = arith.constant 21 : i32
      %cst_228 = arith.constant 1.000000e+01 : f32
      %653 = vector.broadcast %cst_228 : f32 to vector<1x1xf32>
      %654 = arith.cmpf ogt, %652, %653 : vector<1x1xf32>
      %655 = arith.index_cast %c21_i32 : i32 to index
      %c0_229 = arith.constant 0 : index
      %656 = vector.load %arg2[%655, %c0_229] : memref<32x128xi32, #tpu.memory_space<vmem>>, vector<1x128xi32>
      %c2147483520_i32_230 = arith.constant 2147483520 : i32
      %657 = vector.broadcast %c2147483520_i32_230 : i32 to vector<1x128xi32>
      %658 = arith.andi %656, %657 : vector<1x128xi32>
      %659 = arith.ori %658, %14 : vector<1x128xi32>
      %cst_231 = arith.constant 1.000000e+00 : f32
      %660 = vector.broadcast %cst_231 : f32 to vector<1x128xf32>
      %661 = arith.cmpf ogt, %651, %660 : vector<1x128xf32>
      %662 = arith.andi %16, %661 : vector<1x128xi1>
      %c-1_i32_232 = arith.constant -1 : i32
      %663 = vector.broadcast %c-1_i32_232 : i32 to vector<1x128xi32>
      %664 = arith.select %662, %659, %663 : vector<1x128xi1>, vector<1x128xi32>
      %cst_233 = arith.constant dense<-2147483648> : vector<1xi32>
      %665 = vector.multi_reduction <maxsi>, %664, %cst_233 [1] : vector<1x128xi32> to vector<1xi32>
      %666 = vector.shape_cast %665 : vector<1xi32> to vector<1x1xi32>
      %667 = vector.broadcast %666 : vector<1x1xi32> to vector<1x128xi32>
      %668 = arith.cmpi eq, %664, %667 : vector<1x128xi32>
      %669 = arith.andi %662, %668 : vector<1x128xi1>
      %670 = vector.broadcast %654 : vector<1x1xi1> to vector<1x128xi1>
      %671 = arith.andi %669, %670 : vector<1x128xi1>
      %cst_234 = arith.constant 1.000000e+00 : f32
      %672 = vector.broadcast %cst_234 : f32 to vector<1x128xf32>
      %673 = arith.subf %651, %672 : vector<1x128xf32>
      %cst_235 = arith.constant 1.000000e+00 : f32
      %674 = vector.broadcast %cst_235 : f32 to vector<1x128xf32>
      %675 = arith.minimumf %674, %673 : vector<1x128xf32>
      %cst_236 = arith.constant 0.000000e+00 : f32
      %676 = vector.broadcast %cst_236 : f32 to vector<1x128xf32>
      %677 = arith.select %671, %675, %676 : vector<1x128xi1>, vector<1x128xf32>
      %cst_237 = arith.constant dense<0.000000e+00> : vector<1xf32>
      %678 = vector.multi_reduction <add>, %677, %cst_237 [1] : vector<1x128xf32> to vector<1xf32>
      %679 = vector.shape_cast %678 : vector<1xf32> to vector<1x1xf32>
      %680 = arith.subf %651, %677 : vector<1x128xf32>
      %681 = arith.subf %652, %679 : vector<1x1xf32>
      %c22_i32 = arith.constant 22 : i32
      %cst_238 = arith.constant 1.000000e+01 : f32
      %682 = vector.broadcast %cst_238 : f32 to vector<1x1xf32>
      %683 = arith.cmpf ogt, %681, %682 : vector<1x1xf32>
      %684 = arith.index_cast %c22_i32 : i32 to index
      %c0_239 = arith.constant 0 : index
      %685 = vector.load %arg2[%684, %c0_239] : memref<32x128xi32, #tpu.memory_space<vmem>>, vector<1x128xi32>
      %c2147483520_i32_240 = arith.constant 2147483520 : i32
      %686 = vector.broadcast %c2147483520_i32_240 : i32 to vector<1x128xi32>
      %687 = arith.andi %685, %686 : vector<1x128xi32>
      %688 = arith.ori %687, %14 : vector<1x128xi32>
      %cst_241 = arith.constant 1.000000e+00 : f32
      %689 = vector.broadcast %cst_241 : f32 to vector<1x128xf32>
      %690 = arith.cmpf ogt, %680, %689 : vector<1x128xf32>
      %691 = arith.andi %16, %690 : vector<1x128xi1>
      %c-1_i32_242 = arith.constant -1 : i32
      %692 = vector.broadcast %c-1_i32_242 : i32 to vector<1x128xi32>
      %693 = arith.select %691, %688, %692 : vector<1x128xi1>, vector<1x128xi32>
      %cst_243 = arith.constant dense<-2147483648> : vector<1xi32>
      %694 = vector.multi_reduction <maxsi>, %693, %cst_243 [1] : vector<1x128xi32> to vector<1xi32>
      %695 = vector.shape_cast %694 : vector<1xi32> to vector<1x1xi32>
      %696 = vector.broadcast %695 : vector<1x1xi32> to vector<1x128xi32>
      %697 = arith.cmpi eq, %693, %696 : vector<1x128xi32>
      %698 = arith.andi %691, %697 : vector<1x128xi1>
      %699 = vector.broadcast %683 : vector<1x1xi1> to vector<1x128xi1>
      %700 = arith.andi %698, %699 : vector<1x128xi1>
      %cst_244 = arith.constant 1.000000e+00 : f32
      %701 = vector.broadcast %cst_244 : f32 to vector<1x128xf32>
      %702 = arith.subf %680, %701 : vector<1x128xf32>
      %cst_245 = arith.constant 1.000000e+00 : f32
      %703 = vector.broadcast %cst_245 : f32 to vector<1x128xf32>
      %704 = arith.minimumf %703, %702 : vector<1x128xf32>
      %cst_246 = arith.constant 0.000000e+00 : f32
      %705 = vector.broadcast %cst_246 : f32 to vector<1x128xf32>
      %706 = arith.select %700, %704, %705 : vector<1x128xi1>, vector<1x128xf32>
      %cst_247 = arith.constant dense<0.000000e+00> : vector<1xf32>
      %707 = vector.multi_reduction <add>, %706, %cst_247 [1] : vector<1x128xf32> to vector<1xf32>
      %708 = vector.shape_cast %707 : vector<1xf32> to vector<1x1xf32>
      %709 = arith.subf %680, %706 : vector<1x128xf32>
      %710 = arith.subf %681, %708 : vector<1x1xf32>
      %c23_i32 = arith.constant 23 : i32
      %cst_248 = arith.constant 1.000000e+01 : f32
      %711 = vector.broadcast %cst_248 : f32 to vector<1x1xf32>
      %712 = arith.cmpf ogt, %710, %711 : vector<1x1xf32>
      %713 = arith.index_cast %c23_i32 : i32 to index
      %c0_249 = arith.constant 0 : index
      %714 = vector.load %arg2[%713, %c0_249] : memref<32x128xi32, #tpu.memory_space<vmem>>, vector<1x128xi32>
      %c2147483520_i32_250 = arith.constant 2147483520 : i32
      %715 = vector.broadcast %c2147483520_i32_250 : i32 to vector<1x128xi32>
      %716 = arith.andi %714, %715 : vector<1x128xi32>
      %717 = arith.ori %716, %14 : vector<1x128xi32>
      %cst_251 = arith.constant 1.000000e+00 : f32
      %718 = vector.broadcast %cst_251 : f32 to vector<1x128xf32>
      %719 = arith.cmpf ogt, %709, %718 : vector<1x128xf32>
      %720 = arith.andi %16, %719 : vector<1x128xi1>
      %c-1_i32_252 = arith.constant -1 : i32
      %721 = vector.broadcast %c-1_i32_252 : i32 to vector<1x128xi32>
      %722 = arith.select %720, %717, %721 : vector<1x128xi1>, vector<1x128xi32>
      %cst_253 = arith.constant dense<-2147483648> : vector<1xi32>
      %723 = vector.multi_reduction <maxsi>, %722, %cst_253 [1] : vector<1x128xi32> to vector<1xi32>
      %724 = vector.shape_cast %723 : vector<1xi32> to vector<1x1xi32>
      %725 = vector.broadcast %724 : vector<1x1xi32> to vector<1x128xi32>
      %726 = arith.cmpi eq, %722, %725 : vector<1x128xi32>
      %727 = arith.andi %720, %726 : vector<1x128xi1>
      %728 = vector.broadcast %712 : vector<1x1xi1> to vector<1x128xi1>
      %729 = arith.andi %727, %728 : vector<1x128xi1>
      %cst_254 = arith.constant 1.000000e+00 : f32
      %730 = vector.broadcast %cst_254 : f32 to vector<1x128xf32>
      %731 = arith.subf %709, %730 : vector<1x128xf32>
      %cst_255 = arith.constant 1.000000e+00 : f32
      %732 = vector.broadcast %cst_255 : f32 to vector<1x128xf32>
      %733 = arith.minimumf %732, %731 : vector<1x128xf32>
      %cst_256 = arith.constant 0.000000e+00 : f32
      %734 = vector.broadcast %cst_256 : f32 to vector<1x128xf32>
      %735 = arith.select %729, %733, %734 : vector<1x128xi1>, vector<1x128xf32>
      %cst_257 = arith.constant dense<0.000000e+00> : vector<1xf32>
      %736 = vector.multi_reduction <add>, %735, %cst_257 [1] : vector<1x128xf32> to vector<1xf32>
      %737 = vector.shape_cast %736 : vector<1xf32> to vector<1x1xf32>
      %738 = arith.subf %709, %735 : vector<1x128xf32>
      %739 = arith.subf %710, %737 : vector<1x1xf32>
      %c24_i32 = arith.constant 24 : i32
      %cst_258 = arith.constant 1.000000e+01 : f32
      %740 = vector.broadcast %cst_258 : f32 to vector<1x1xf32>
      %741 = arith.cmpf ogt, %739, %740 : vector<1x1xf32>
      %742 = arith.index_cast %c24_i32 : i32 to index
      %c0_259 = arith.constant 0 : index
      %743 = vector.load %arg2[%742, %c0_259] : memref<32x128xi32, #tpu.memory_space<vmem>>, vector<1x128xi32>
      %c2147483520_i32_260 = arith.constant 2147483520 : i32
      %744 = vector.broadcast %c2147483520_i32_260 : i32 to vector<1x128xi32>
      %745 = arith.andi %743, %744 : vector<1x128xi32>
      %746 = arith.ori %745, %14 : vector<1x128xi32>
      %cst_261 = arith.constant 1.000000e+00 : f32
      %747 = vector.broadcast %cst_261 : f32 to vector<1x128xf32>
      %748 = arith.cmpf ogt, %738, %747 : vector<1x128xf32>
      %749 = arith.andi %16, %748 : vector<1x128xi1>
      %c-1_i32_262 = arith.constant -1 : i32
      %750 = vector.broadcast %c-1_i32_262 : i32 to vector<1x128xi32>
      %751 = arith.select %749, %746, %750 : vector<1x128xi1>, vector<1x128xi32>
      %cst_263 = arith.constant dense<-2147483648> : vector<1xi32>
      %752 = vector.multi_reduction <maxsi>, %751, %cst_263 [1] : vector<1x128xi32> to vector<1xi32>
      %753 = vector.shape_cast %752 : vector<1xi32> to vector<1x1xi32>
      %754 = vector.broadcast %753 : vector<1x1xi32> to vector<1x128xi32>
      %755 = arith.cmpi eq, %751, %754 : vector<1x128xi32>
      %756 = arith.andi %749, %755 : vector<1x128xi1>
      %757 = vector.broadcast %741 : vector<1x1xi1> to vector<1x128xi1>
      %758 = arith.andi %756, %757 : vector<1x128xi1>
      %cst_264 = arith.constant 1.000000e+00 : f32
      %759 = vector.broadcast %cst_264 : f32 to vector<1x128xf32>
      %760 = arith.subf %738, %759 : vector<1x128xf32>
      %cst_265 = arith.constant 1.000000e+00 : f32
      %761 = vector.broadcast %cst_265 : f32 to vector<1x128xf32>
      %762 = arith.minimumf %761, %760 : vector<1x128xf32>
      %cst_266 = arith.constant 0.000000e+00 : f32
      %763 = vector.broadcast %cst_266 : f32 to vector<1x128xf32>
      %764 = arith.select %758, %762, %763 : vector<1x128xi1>, vector<1x128xf32>
      %cst_267 = arith.constant dense<0.000000e+00> : vector<1xf32>
      %765 = vector.multi_reduction <add>, %764, %cst_267 [1] : vector<1x128xf32> to vector<1xf32>
      %766 = vector.shape_cast %765 : vector<1xf32> to vector<1x1xf32>
      %767 = arith.subf %738, %764 : vector<1x128xf32>
      %768 = arith.subf %739, %766 : vector<1x1xf32>
      %c25_i32 = arith.constant 25 : i32
      %cst_268 = arith.constant 1.000000e+01 : f32
      %769 = vector.broadcast %cst_268 : f32 to vector<1x1xf32>
      %770 = arith.cmpf ogt, %768, %769 : vector<1x1xf32>
      %771 = arith.index_cast %c25_i32 : i32 to index
      %c0_269 = arith.constant 0 : index
      %772 = vector.load %arg2[%771, %c0_269] : memref<32x128xi32, #tpu.memory_space<vmem>>, vector<1x128xi32>
      %c2147483520_i32_270 = arith.constant 2147483520 : i32
      %773 = vector.broadcast %c2147483520_i32_270 : i32 to vector<1x128xi32>
      %774 = arith.andi %772, %773 : vector<1x128xi32>
      %775 = arith.ori %774, %14 : vector<1x128xi32>
      %cst_271 = arith.constant 1.000000e+00 : f32
      %776 = vector.broadcast %cst_271 : f32 to vector<1x128xf32>
      %777 = arith.cmpf ogt, %767, %776 : vector<1x128xf32>
      %778 = arith.andi %16, %777 : vector<1x128xi1>
      %c-1_i32_272 = arith.constant -1 : i32
      %779 = vector.broadcast %c-1_i32_272 : i32 to vector<1x128xi32>
      %780 = arith.select %778, %775, %779 : vector<1x128xi1>, vector<1x128xi32>
      %cst_273 = arith.constant dense<-2147483648> : vector<1xi32>
      %781 = vector.multi_reduction <maxsi>, %780, %cst_273 [1] : vector<1x128xi32> to vector<1xi32>
      %782 = vector.shape_cast %781 : vector<1xi32> to vector<1x1xi32>
      %783 = vector.broadcast %782 : vector<1x1xi32> to vector<1x128xi32>
      %784 = arith.cmpi eq, %780, %783 : vector<1x128xi32>
      %785 = arith.andi %778, %784 : vector<1x128xi1>
      %786 = vector.broadcast %770 : vector<1x1xi1> to vector<1x128xi1>
      %787 = arith.andi %785, %786 : vector<1x128xi1>
      %cst_274 = arith.constant 1.000000e+00 : f32
      %788 = vector.broadcast %cst_274 : f32 to vector<1x128xf32>
      %789 = arith.subf %767, %788 : vector<1x128xf32>
      %cst_275 = arith.constant 1.000000e+00 : f32
      %790 = vector.broadcast %cst_275 : f32 to vector<1x128xf32>
      %791 = arith.minimumf %790, %789 : vector<1x128xf32>
      %cst_276 = arith.constant 0.000000e+00 : f32
      %792 = vector.broadcast %cst_276 : f32 to vector<1x128xf32>
      %793 = arith.select %787, %791, %792 : vector<1x128xi1>, vector<1x128xf32>
      %cst_277 = arith.constant dense<0.000000e+00> : vector<1xf32>
      %794 = vector.multi_reduction <add>, %793, %cst_277 [1] : vector<1x128xf32> to vector<1xf32>
      %795 = vector.shape_cast %794 : vector<1xf32> to vector<1x1xf32>
      %796 = arith.subf %767, %793 : vector<1x128xf32>
      %797 = arith.subf %768, %795 : vector<1x1xf32>
      %c26_i32 = arith.constant 26 : i32
      %cst_278 = arith.constant 1.000000e+01 : f32
      %798 = vector.broadcast %cst_278 : f32 to vector<1x1xf32>
      %799 = arith.cmpf ogt, %797, %798 : vector<1x1xf32>
      %800 = arith.index_cast %c26_i32 : i32 to index
      %c0_279 = arith.constant 0 : index
      %801 = vector.load %arg2[%800, %c0_279] : memref<32x128xi32, #tpu.memory_space<vmem>>, vector<1x128xi32>
      %c2147483520_i32_280 = arith.constant 2147483520 : i32
      %802 = vector.broadcast %c2147483520_i32_280 : i32 to vector<1x128xi32>
      %803 = arith.andi %801, %802 : vector<1x128xi32>
      %804 = arith.ori %803, %14 : vector<1x128xi32>
      %cst_281 = arith.constant 1.000000e+00 : f32
      %805 = vector.broadcast %cst_281 : f32 to vector<1x128xf32>
      %806 = arith.cmpf ogt, %796, %805 : vector<1x128xf32>
      %807 = arith.andi %16, %806 : vector<1x128xi1>
      %c-1_i32_282 = arith.constant -1 : i32
      %808 = vector.broadcast %c-1_i32_282 : i32 to vector<1x128xi32>
      %809 = arith.select %807, %804, %808 : vector<1x128xi1>, vector<1x128xi32>
      %cst_283 = arith.constant dense<-2147483648> : vector<1xi32>
      %810 = vector.multi_reduction <maxsi>, %809, %cst_283 [1] : vector<1x128xi32> to vector<1xi32>
      %811 = vector.shape_cast %810 : vector<1xi32> to vector<1x1xi32>
      %812 = vector.broadcast %811 : vector<1x1xi32> to vector<1x128xi32>
      %813 = arith.cmpi eq, %809, %812 : vector<1x128xi32>
      %814 = arith.andi %807, %813 : vector<1x128xi1>
      %815 = vector.broadcast %799 : vector<1x1xi1> to vector<1x128xi1>
      %816 = arith.andi %814, %815 : vector<1x128xi1>
      %cst_284 = arith.constant 1.000000e+00 : f32
      %817 = vector.broadcast %cst_284 : f32 to vector<1x128xf32>
      %818 = arith.subf %796, %817 : vector<1x128xf32>
      %cst_285 = arith.constant 1.000000e+00 : f32
      %819 = vector.broadcast %cst_285 : f32 to vector<1x128xf32>
      %820 = arith.minimumf %819, %818 : vector<1x128xf32>
      %cst_286 = arith.constant 0.000000e+00 : f32
      %821 = vector.broadcast %cst_286 : f32 to vector<1x128xf32>
      %822 = arith.select %816, %820, %821 : vector<1x128xi1>, vector<1x128xf32>
      %cst_287 = arith.constant dense<0.000000e+00> : vector<1xf32>
      %823 = vector.multi_reduction <add>, %822, %cst_287 [1] : vector<1x128xf32> to vector<1xf32>
      %824 = vector.shape_cast %823 : vector<1xf32> to vector<1x1xf32>
      %825 = arith.subf %796, %822 : vector<1x128xf32>
      %826 = arith.subf %797, %824 : vector<1x1xf32>
      %c27_i32 = arith.constant 27 : i32
      %cst_288 = arith.constant 1.000000e+01 : f32
      %827 = vector.broadcast %cst_288 : f32 to vector<1x1xf32>
      %828 = arith.cmpf ogt, %826, %827 : vector<1x1xf32>
      %829 = arith.index_cast %c27_i32 : i32 to index
      %c0_289 = arith.constant 0 : index
      %830 = vector.load %arg2[%829, %c0_289] : memref<32x128xi32, #tpu.memory_space<vmem>>, vector<1x128xi32>
      %c2147483520_i32_290 = arith.constant 2147483520 : i32
      %831 = vector.broadcast %c2147483520_i32_290 : i32 to vector<1x128xi32>
      %832 = arith.andi %830, %831 : vector<1x128xi32>
      %833 = arith.ori %832, %14 : vector<1x128xi32>
      %cst_291 = arith.constant 1.000000e+00 : f32
      %834 = vector.broadcast %cst_291 : f32 to vector<1x128xf32>
      %835 = arith.cmpf ogt, %825, %834 : vector<1x128xf32>
      %836 = arith.andi %16, %835 : vector<1x128xi1>
      %c-1_i32_292 = arith.constant -1 : i32
      %837 = vector.broadcast %c-1_i32_292 : i32 to vector<1x128xi32>
      %838 = arith.select %836, %833, %837 : vector<1x128xi1>, vector<1x128xi32>
      %cst_293 = arith.constant dense<-2147483648> : vector<1xi32>
      %839 = vector.multi_reduction <maxsi>, %838, %cst_293 [1] : vector<1x128xi32> to vector<1xi32>
      %840 = vector.shape_cast %839 : vector<1xi32> to vector<1x1xi32>
      %841 = vector.broadcast %840 : vector<1x1xi32> to vector<1x128xi32>
      %842 = arith.cmpi eq, %838, %841 : vector<1x128xi32>
      %843 = arith.andi %836, %842 : vector<1x128xi1>
      %844 = vector.broadcast %828 : vector<1x1xi1> to vector<1x128xi1>
      %845 = arith.andi %843, %844 : vector<1x128xi1>
      %cst_294 = arith.constant 1.000000e+00 : f32
      %846 = vector.broadcast %cst_294 : f32 to vector<1x128xf32>
      %847 = arith.subf %825, %846 : vector<1x128xf32>
      %cst_295 = arith.constant 1.000000e+00 : f32
      %848 = vector.broadcast %cst_295 : f32 to vector<1x128xf32>
      %849 = arith.minimumf %848, %847 : vector<1x128xf32>
      %cst_296 = arith.constant 0.000000e+00 : f32
      %850 = vector.broadcast %cst_296 : f32 to vector<1x128xf32>
      %851 = arith.select %845, %849, %850 : vector<1x128xi1>, vector<1x128xf32>
      %cst_297 = arith.constant dense<0.000000e+00> : vector<1xf32>
      %852 = vector.multi_reduction <add>, %851, %cst_297 [1] : vector<1x128xf32> to vector<1xf32>
      %853 = vector.shape_cast %852 : vector<1xf32> to vector<1x1xf32>
      %854 = arith.subf %825, %851 : vector<1x128xf32>
      %855 = arith.subf %826, %853 : vector<1x1xf32>
      %c28_i32 = arith.constant 28 : i32
      %cst_298 = arith.constant 1.000000e+01 : f32
      %856 = vector.broadcast %cst_298 : f32 to vector<1x1xf32>
      %857 = arith.cmpf ogt, %855, %856 : vector<1x1xf32>
      %858 = arith.index_cast %c28_i32 : i32 to index
      %c0_299 = arith.constant 0 : index
      %859 = vector.load %arg2[%858, %c0_299] : memref<32x128xi32, #tpu.memory_space<vmem>>, vector<1x128xi32>
      %c2147483520_i32_300 = arith.constant 2147483520 : i32
      %860 = vector.broadcast %c2147483520_i32_300 : i32 to vector<1x128xi32>
      %861 = arith.andi %859, %860 : vector<1x128xi32>
      %862 = arith.ori %861, %14 : vector<1x128xi32>
      %cst_301 = arith.constant 1.000000e+00 : f32
      %863 = vector.broadcast %cst_301 : f32 to vector<1x128xf32>
      %864 = arith.cmpf ogt, %854, %863 : vector<1x128xf32>
      %865 = arith.andi %16, %864 : vector<1x128xi1>
      %c-1_i32_302 = arith.constant -1 : i32
      %866 = vector.broadcast %c-1_i32_302 : i32 to vector<1x128xi32>
      %867 = arith.select %865, %862, %866 : vector<1x128xi1>, vector<1x128xi32>
      %cst_303 = arith.constant dense<-2147483648> : vector<1xi32>
      %868 = vector.multi_reduction <maxsi>, %867, %cst_303 [1] : vector<1x128xi32> to vector<1xi32>
      %869 = vector.shape_cast %868 : vector<1xi32> to vector<1x1xi32>
      %870 = vector.broadcast %869 : vector<1x1xi32> to vector<1x128xi32>
      %871 = arith.cmpi eq, %867, %870 : vector<1x128xi32>
      %872 = arith.andi %865, %871 : vector<1x128xi1>
      %873 = vector.broadcast %857 : vector<1x1xi1> to vector<1x128xi1>
      %874 = arith.andi %872, %873 : vector<1x128xi1>
      %cst_304 = arith.constant 1.000000e+00 : f32
      %875 = vector.broadcast %cst_304 : f32 to vector<1x128xf32>
      %876 = arith.subf %854, %875 : vector<1x128xf32>
      %cst_305 = arith.constant 1.000000e+00 : f32
      %877 = vector.broadcast %cst_305 : f32 to vector<1x128xf32>
      %878 = arith.minimumf %877, %876 : vector<1x128xf32>
      %cst_306 = arith.constant 0.000000e+00 : f32
      %879 = vector.broadcast %cst_306 : f32 to vector<1x128xf32>
      %880 = arith.select %874, %878, %879 : vector<1x128xi1>, vector<1x128xf32>
      %cst_307 = arith.constant dense<0.000000e+00> : vector<1xf32>
      %881 = vector.multi_reduction <add>, %880, %cst_307 [1] : vector<1x128xf32> to vector<1xf32>
      %882 = vector.shape_cast %881 : vector<1xf32> to vector<1x1xf32>
      %883 = arith.subf %854, %880 : vector<1x128xf32>
      %884 = arith.subf %855, %882 : vector<1x1xf32>
      %c29_i32 = arith.constant 29 : i32
      %cst_308 = arith.constant 1.000000e+01 : f32
      %885 = vector.broadcast %cst_308 : f32 to vector<1x1xf32>
      %886 = arith.cmpf ogt, %884, %885 : vector<1x1xf32>
      %887 = arith.index_cast %c29_i32 : i32 to index
      %c0_309 = arith.constant 0 : index
      %888 = vector.load %arg2[%887, %c0_309] : memref<32x128xi32, #tpu.memory_space<vmem>>, vector<1x128xi32>
      %c2147483520_i32_310 = arith.constant 2147483520 : i32
      %889 = vector.broadcast %c2147483520_i32_310 : i32 to vector<1x128xi32>
      %890 = arith.andi %888, %889 : vector<1x128xi32>
      %891 = arith.ori %890, %14 : vector<1x128xi32>
      %cst_311 = arith.constant 1.000000e+00 : f32
      %892 = vector.broadcast %cst_311 : f32 to vector<1x128xf32>
      %893 = arith.cmpf ogt, %883, %892 : vector<1x128xf32>
      %894 = arith.andi %16, %893 : vector<1x128xi1>
      %c-1_i32_312 = arith.constant -1 : i32
      %895 = vector.broadcast %c-1_i32_312 : i32 to vector<1x128xi32>
      %896 = arith.select %894, %891, %895 : vector<1x128xi1>, vector<1x128xi32>
      %cst_313 = arith.constant dense<-2147483648> : vector<1xi32>
      %897 = vector.multi_reduction <maxsi>, %896, %cst_313 [1] : vector<1x128xi32> to vector<1xi32>
      %898 = vector.shape_cast %897 : vector<1xi32> to vector<1x1xi32>
      %899 = vector.broadcast %898 : vector<1x1xi32> to vector<1x128xi32>
      %900 = arith.cmpi eq, %896, %899 : vector<1x128xi32>
      %901 = arith.andi %894, %900 : vector<1x128xi1>
      %902 = vector.broadcast %886 : vector<1x1xi1> to vector<1x128xi1>
      %903 = arith.andi %901, %902 : vector<1x128xi1>
      %cst_314 = arith.constant 1.000000e+00 : f32
      %904 = vector.broadcast %cst_314 : f32 to vector<1x128xf32>
      %905 = arith.subf %883, %904 : vector<1x128xf32>
      %cst_315 = arith.constant 1.000000e+00 : f32
      %906 = vector.broadcast %cst_315 : f32 to vector<1x128xf32>
      %907 = arith.minimumf %906, %905 : vector<1x128xf32>
      %cst_316 = arith.constant 0.000000e+00 : f32
      %908 = vector.broadcast %cst_316 : f32 to vector<1x128xf32>
      %909 = arith.select %903, %907, %908 : vector<1x128xi1>, vector<1x128xf32>
      %cst_317 = arith.constant dense<0.000000e+00> : vector<1xf32>
      %910 = vector.multi_reduction <add>, %909, %cst_317 [1] : vector<1x128xf32> to vector<1xf32>
      %911 = vector.shape_cast %910 : vector<1xf32> to vector<1x1xf32>
      %912 = arith.subf %883, %909 : vector<1x128xf32>
      %913 = arith.subf %884, %911 : vector<1x1xf32>
      %c30_i32 = arith.constant 30 : i32
      %cst_318 = arith.constant 1.000000e+01 : f32
      %914 = vector.broadcast %cst_318 : f32 to vector<1x1xf32>
      %915 = arith.cmpf ogt, %913, %914 : vector<1x1xf32>
      %916 = arith.index_cast %c30_i32 : i32 to index
      %c0_319 = arith.constant 0 : index
      %917 = vector.load %arg2[%916, %c0_319] : memref<32x128xi32, #tpu.memory_space<vmem>>, vector<1x128xi32>
      %c2147483520_i32_320 = arith.constant 2147483520 : i32
      %918 = vector.broadcast %c2147483520_i32_320 : i32 to vector<1x128xi32>
      %919 = arith.andi %917, %918 : vector<1x128xi32>
      %920 = arith.ori %919, %14 : vector<1x128xi32>
      %cst_321 = arith.constant 1.000000e+00 : f32
      %921 = vector.broadcast %cst_321 : f32 to vector<1x128xf32>
      %922 = arith.cmpf ogt, %912, %921 : vector<1x128xf32>
      %923 = arith.andi %16, %922 : vector<1x128xi1>
      %c-1_i32_322 = arith.constant -1 : i32
      %924 = vector.broadcast %c-1_i32_322 : i32 to vector<1x128xi32>
      %925 = arith.select %923, %920, %924 : vector<1x128xi1>, vector<1x128xi32>
      %cst_323 = arith.constant dense<-2147483648> : vector<1xi32>
      %926 = vector.multi_reduction <maxsi>, %925, %cst_323 [1] : vector<1x128xi32> to vector<1xi32>
      %927 = vector.shape_cast %926 : vector<1xi32> to vector<1x1xi32>
      %928 = vector.broadcast %927 : vector<1x1xi32> to vector<1x128xi32>
      %929 = arith.cmpi eq, %925, %928 : vector<1x128xi32>
      %930 = arith.andi %923, %929 : vector<1x128xi1>
      %931 = vector.broadcast %915 : vector<1x1xi1> to vector<1x128xi1>
      %932 = arith.andi %930, %931 : vector<1x128xi1>
      %cst_324 = arith.constant 1.000000e+00 : f32
      %933 = vector.broadcast %cst_324 : f32 to vector<1x128xf32>
      %934 = arith.subf %912, %933 : vector<1x128xf32>
      %cst_325 = arith.constant 1.000000e+00 : f32
      %935 = vector.broadcast %cst_325 : f32 to vector<1x128xf32>
      %936 = arith.minimumf %935, %934 : vector<1x128xf32>
      %cst_326 = arith.constant 0.000000e+00 : f32
      %937 = vector.broadcast %cst_326 : f32 to vector<1x128xf32>
      %938 = arith.select %932, %936, %937 : vector<1x128xi1>, vector<1x128xf32>
      %cst_327 = arith.constant dense<0.000000e+00> : vector<1xf32>
      %939 = vector.multi_reduction <add>, %938, %cst_327 [1] : vector<1x128xf32> to vector<1xf32>
      %940 = vector.shape_cast %939 : vector<1xf32> to vector<1x1xf32>
      %941 = arith.subf %912, %938 : vector<1x128xf32>
      %942 = arith.subf %913, %940 : vector<1x1xf32>
      %c31_i32 = arith.constant 31 : i32
      %cst_328 = arith.constant 1.000000e+01 : f32
      %943 = vector.broadcast %cst_328 : f32 to vector<1x1xf32>
      %944 = arith.cmpf ogt, %942, %943 : vector<1x1xf32>
      %945 = arith.index_cast %c31_i32 : i32 to index
      %c0_329 = arith.constant 0 : index
      %946 = vector.load %arg2[%945, %c0_329] : memref<32x128xi32, #tpu.memory_space<vmem>>, vector<1x128xi32>
      %c2147483520_i32_330 = arith.constant 2147483520 : i32
      %947 = vector.broadcast %c2147483520_i32_330 : i32 to vector<1x128xi32>
      %948 = arith.andi %946, %947 : vector<1x128xi32>
      %949 = arith.ori %948, %14 : vector<1x128xi32>
      %cst_331 = arith.constant 1.000000e+00 : f32
      %950 = vector.broadcast %cst_331 : f32 to vector<1x128xf32>
      %951 = arith.cmpf ogt, %941, %950 : vector<1x128xf32>
      %952 = arith.andi %16, %951 : vector<1x128xi1>
      %c-1_i32_332 = arith.constant -1 : i32
      %953 = vector.broadcast %c-1_i32_332 : i32 to vector<1x128xi32>
      %954 = arith.select %952, %949, %953 : vector<1x128xi1>, vector<1x128xi32>
      %cst_333 = arith.constant dense<-2147483648> : vector<1xi32>
      %955 = vector.multi_reduction <maxsi>, %954, %cst_333 [1] : vector<1x128xi32> to vector<1xi32>
      %956 = vector.shape_cast %955 : vector<1xi32> to vector<1x1xi32>
      %957 = vector.broadcast %956 : vector<1x1xi32> to vector<1x128xi32>
      %958 = arith.cmpi eq, %954, %957 : vector<1x128xi32>
      %959 = arith.andi %952, %958 : vector<1x128xi1>
      %960 = vector.broadcast %944 : vector<1x1xi1> to vector<1x128xi1>
      %961 = arith.andi %959, %960 : vector<1x128xi1>
      %cst_334 = arith.constant 1.000000e+00 : f32
      %962 = vector.broadcast %cst_334 : f32 to vector<1x128xf32>
      %963 = arith.subf %941, %962 : vector<1x128xf32>
      %cst_335 = arith.constant 1.000000e+00 : f32
      %964 = vector.broadcast %cst_335 : f32 to vector<1x128xf32>
      %965 = arith.minimumf %964, %963 : vector<1x128xf32>
      %cst_336 = arith.constant 0.000000e+00 : f32
      %966 = vector.broadcast %cst_336 : f32 to vector<1x128xf32>
      %967 = arith.select %961, %965, %966 : vector<1x128xi1>, vector<1x128xf32>
      %cst_337 = arith.constant dense<0.000000e+00> : vector<1xf32>
      %968 = vector.multi_reduction <add>, %967, %cst_337 [1] : vector<1x128xf32> to vector<1xf32>
      %969 = vector.shape_cast %968 : vector<1xf32> to vector<1x1xf32>
      %970 = arith.subf %941, %967 : vector<1x128xf32>
      %971 = arith.subf %942, %969 : vector<1x1xf32>
      %c32_i32 = arith.constant 32 : i32
      %c0_338 = arith.constant 0 : index
      %c0_339 = arith.constant 0 : index
      %972 = vector.load %arg3[%c0_338, %c0_339] : memref<1x128xf32, #tpu.memory_space<vmem>>, vector<1x128xf32>
      tpu.vector_store %arg3[%c0_338, %c0_339], %970 {strides = array<i32>} : memref<1x128xf32, #tpu.memory_space<vmem>>, vector<1x128xf32>,
    } else {
    }
    return
  }
}

</mosaic_0001>

<llo_original>
// kernel: net_forward.1
$region0: #{net_forward.1}
  #allocation0 [shape = 'u32[]', space=smem, size = 0x4, offset = 0x4, fixed_abs, tag = 'smem constant byte address 0x4 - core index']
  #allocation1 [shape = 'u32[144,128]{1,0:T(1,128)}', space=vmem, size = 0x12000, scoped, tag = 'internal scratch']
  %s0 = inlined_call_operand.vmem [shape: f32[1,128], index: 0, kind: input, shape index: {}]
  %s1 = inlined_call_operand.vmem [shape: f32[8,128], index: 1, kind: input, shape index: {}]
  %s2 = inlined_call_operand.vmem [shape: s32[32,128], index: 2, kind: input, shape index: {}]
  %s3 = inlined_call_operand.vmem [shape: f32[1,128], index: 3, kind: output, shape index: {}]
  %s4 = sld [smem:[#allocation0]]
  $region26: #{net_forward.1} parent=0
    _
  %s6 = ssub.s32 1, %s4
  %s7 = scalar_select 0, %s6, %s4
  // Predicated region
  $region2: #{net_forward.1} parent=0 // pred_check
    _
  $region3: #{net_forward.1} parent=0 // pred_check_branch
    %9 = sbr.rel (0) target = $region5
  $region4: #{net_forward.1} parent=0 // pred_region
    _
  $region5: #{net_forward.1} parent=0 // pred_fallthru
    _
  // Predicated region
  $region6: #{net_forward.1} parent=0 // pred_check
    _
  $region7: #{net_forward.1} parent=0 // pred_check_branch
    %11 = sbr.rel (0) target = $region9
  $region8: #{net_forward.1} parent=0 // pred_region
    _
  $region9: #{net_forward.1} parent=0 // pred_fallthru
    _
  // Predicated region
  $region10: #{net_forward.1} parent=0 // pred_check
    _
  $region11: #{net_forward.1} parent=0 // pred_check_branch
    %13 = sbr.rel (0) target = $region13
  $region12: #{net_forward.1} parent=0 // pred_region
    _
  $region13: #{net_forward.1} parent=0 // pred_fallthru
    _
  %v14 = vld [vmem:[%s0] sm:$0x1]
  %v15 = vld [vmem:[%s1] sm:$0x1]
  %v16 = vmul.f32 %v14, %v15
  %vm17 = vcmask 1040384
  %v18 = vsel %vm17, %v16, 0.0
  %19 = vadd.xlane.f32.xlu0 %v18
  %v20 = vpop.xlane.xlu0 %19
  %v21 = vmax.f32 %v20, 0.0
  %v22 = vld [vmem:[%s1 + $0x1] sm:$0x1]
  %v23 = vmul.f32 %v21, %v22
  %v24 = vld [vmem:[%s1 + $0x2] sm:$0x1]
  %v25 = vadd.f32 %v23, %v24
  %v26 = vmax.f32 %v25, 0.0
  %v27 = vlaneseq
  %v28 = vand.u32 %v27, 127
  %vm29 = vcmp.lt.s32.totalorder %v28, 4
  %v30 = vld [vmem:[%s1 + $0x3] sm:$0xf]
  %v31 = vlaneseq
  %v32 = vshrl.u32 %v31, 7
  %v33 = vsub.s32 0, %v32
  %v34 = vrot.slane %v26, %v33
  %v35 = vmul.f32 %v34, %v30
  %vm36 = vcmask 1043456
  %v37 = vsel %vm36, %v35, 0.0
  %38 = vadd.xlane.f32.xlu0 %v37
  %v39 = vpop.xlane.xlu0 %38
  %v40 = vlaneseq
  %v41 = vshrl.u32 %v40, 7
  %vm42 = vcmp.eq.s32.totalorder %v28, %v41
  %v43 = vsel %vm42, %v39, 0.0
  %v44 = vsel %vm36, %v43, 0.0
  %v45 = vrot.slane %v44, 4
  %v46 = vadd.f32 %v44, %v45
  %v47 = vrot.slane %v46, 2
  %v48 = vadd.f32 %v46, %v47
  %v49 = vrot.slane %v48, 1
  %v50 = vadd.f32 %v48, %v49
  %v51 = vmax.f32 %v50, 1.0
  %v52 = vmin.f32 %v51, 9.0
  %v53 = vsel %vm29, %v52, 0.0
  %54 = vst [vmem:[%s3] sm:$0x1] %v53
  %55 = vadd.xlane.f32.xlu0 %v53
  %v56 = vpop.xlane.xlu0 %55
  %s57 = vtos %v56
  %p58 = scmp.gt.f32.partialorder %s57, 10.0
  // Predicated region
  $region14: #{net_forward.1} parent=0 // pred_check
    %p59 = pneg %p58
  $region15: #{net_forward.1} parent=0 // pred_check_branch
    %61 = sbr.rel (%p59) target = $region17
  $region16: #{net_forward.1} parent=0 // pred_region
    %vm62 = vcmp.gt.f32.partialorder %v56, 10.0
    %v63 = vld [vmem:[%s2] sm:$0x1]
    %v64 = vand.u32 %v63, 2147483520
    %v65 = vor.u32 %v64, %v28
    %vm66 = vcmp.gt.f32.partialorder %v53, 1.0
    %vm67 = vmand %vm29, %vm66
    %v68 = vsel %vm67, %v65, 4294967295
    %v69 = vsel %vm17, %v68, 2147483648
    %v70 = vand.u32 %v69, 65535
    %v71 = vshra.s32 %v69, 16
    %v72 = vcvt.s32.f32 %v70
    %v73 = vcvt.s32.f32 %v71
    %74 = vmax.xlane.f32.xlu0 %v73
    %v75 = vpop.xlane.xlu0 %74
    %vm76 = vcmp.eq.f32.partialorder %v73, %v75
    %v77 = vsel %vm76, %v72, -inf
    %78 = vmax.xlane.f32.xlu0 %v77
    %v79 = vpop.xlane.xlu0 %78
    %v80 = vcvt.f32.s32 %v79
    %v81 = vcvt.f32.s32 %v75
    %v82 = vshll.u32 %v81, 16
    %v83 = vadd.s32 %v82, %v80
    %vm84 = vcmp.eq.s32.totalorder %v68, %v83
    %vm85 = vmand %vm67, %vm84
    %v86 = vsel %vm62, 1, 0
    %vm87 = vcmp.eq.s32.totalorder %v86, 1
    %vm88 = vmand %vm85, %vm87
    %v89 = vsub.f32 %v53, 1.0
    %v90 = vmin.f32 %v89, 1.0
    %v91 = vsel %vm88, %v90, 0.0
    %v92 = vsel %vm17, %v91, 0.0
    %93 = vadd.xlane.f32.xlu0 %v92
    %v94 = vpop.xlane.xlu0 %93
    %v95 = vsub.f32 %v53, %v91
    %v96 = vsub.f32 %v56, %v94
    %vm97 = vcmp.gt.f32.partialorder %v96, 10.0
    %v98 = vld [vmem:[%s2 + $0x1] sm:$0x1]
    %v99 = vand.u32 %v98, 2147483520
    %v100 = vor.u32 %v99, %v28
    %vm101 = vcmp.gt.f32.partialorder %v95, 1.0
    %vm102 = vmand %vm29, %vm101
    %v103 = vsel %vm102, %v100, 4294967295
    %v104 = vsel %vm17, %v103, 2147483648
    %v105 = vand.u32 %v104, 65535
    %v106 = vshra.s32 %v104, 16
    %v107 = vcvt.s32.f32 %v105
    %v108 = vcvt.s32.f32 %v106
    %109 = vmax.xlane.f32.xlu0 %v108
    %v110 = vpop.xlane.xlu0 %109
    %vm111 = vcmp.eq.f32.partialorder %v108, %v110
    %v112 = vsel %vm111, %v107, -inf
    %113 = vmax.xlane.f32.xlu0 %v112
    %v114 = vpop.xlane.xlu0 %113
    %v115 = vcvt.f32.s32 %v114
    %v116 = vcvt.f32.s32 %v110
    %v117 = vshll.u32 %v116, 16
    %v118 = vadd.s32 %v117, %v115
    %vm119 = vcmp.eq.s32.totalorder %v103, %v118
    %vm120 = vmand %vm102, %vm119
    %v121 = vsel %vm97, 1, 0
    %vm122 = vcmp.eq.s32.totalorder %v121, 1
    %vm123 = vmand %vm120, %vm122
    %v124 = vsub.f32 %v95, 1.0
    %v125 = vmin.f32 %v124, 1.0
    %v126 = vsel %vm123, %v125, 0.0
    %v127 = vsel %vm17, %v126, 0.0
    %128 = vadd.xlane.f32.xlu0 %v127
    %v129 = vpop.xlane.xlu0 %128
    %v130 = vsub.f32 %v95, %v126
    %v131 = vsub.f32 %v96, %v129
    %vm132 = vcmp.gt.f32.partialorder %v131, 10.0
    %v133 = vld [vmem:[%s2 + $0x2] sm:$0x1]
    %v134 = vand.u32 %v133, 2147483520
    %v135 = vor.u32 %v134, %v28
    %vm136 = vcmp.gt.f32.partialorder %v130, 1.0
    %vm137 = vmand %vm29, %vm136
    %v138 = vsel %vm137, %v135, 4294967295
    %v139 = vsel %vm17, %v138, 2147483648
    %v140 = vand.u32 %v139, 65535
    %v141 = vshra.s32 %v139, 16
    %v142 = vcvt.s32.f32 %v140
    %v143 = vcvt.s32.f32 %v141
    %144 = vmax.xlane.f32.xlu0 %v143
    %v145 = vpop.xlane.xlu0 %144
    %vm146 = vcmp.eq.f32.partialorder %v143, %v145
    %v147 = vsel %vm146, %v142, -inf
    %148 = vmax.xlane.f32.xlu0 %v147
    %v149 = vpop.xlane.xlu0 %148
    %v150 = vcvt.f32.s32 %v149
    %v151 = vcvt.f32.s32 %v145
    %v152 = vshll.u32 %v151, 16
    %v153 = vadd.s32 %v152, %v150
    %vm154 = vcmp.eq.s32.totalorder %v138, %v153
    %vm155 = vmand %vm137, %vm154
    %v156 = vsel %vm132, 1, 0
    %vm157 = vcmp.eq.s32.totalorder %v156, 1
    %vm158 = vmand %vm155, %vm157
    %v159 = vsub.f32 %v130, 1.0
    %v160 = vmin.f32 %v159, 1.0
    %v161 = vsel %vm158, %v160, 0.0
    %v162 = vsel %vm17, %v161, 0.0
    %163 = vadd.xlane.f32.xlu0 %v162
    %v164 = vpop.xlane.xlu0 %163
    %v165 = vsub.f32 %v130, %v161
    %v166 = vsub.f32 %v131, %v164
    %vm167 = vcmp.gt.f32.partialorder %v166, 10.0
    %v168 = vld [vmem:[%s2 + $0x3] sm:$0x1]
    %v169 = vand.u32 %v168, 2147483520
    %v170 = vor.u32 %v169, %v28
    %vm171 = vcmp.gt.f32.partialorder %v165, 1.0
    %vm172 = vmand %vm29, %vm171
    %v173 = vsel %vm172, %v170, 4294967295
    %v174 = vsel %vm17, %v173, 2147483648
    %v175 = vand.u32 %v174, 65535
    %v176 = vshra.s32 %v174, 16
    %v177 = vcvt.s32.f32 %v175
    %v178 = vcvt.s32.f32 %v176
    %179 = vmax.xlane.f32.xlu0 %v178
    %v180 = vpop.xlane.xlu0 %179
    %vm181 = vcmp.eq.f32.partialorder %v178, %v180
    %v182 = vsel %vm181, %v177, -inf
    %183 = vmax.xlane.f32.xlu0 %v182
    %v184 = vpop.xlane.xlu0 %183
    %v185 = vcvt.f32.s32 %v184
    %v186 = vcvt.f32.s32 %v180
    %v187 = vshll.u32 %v186, 16
    %v188 = vadd.s32 %v187, %v185
    %vm189 = vcmp.eq.s32.totalorder %v173, %v188
    %vm190 = vmand %vm172, %vm189
    %v191 = vsel %vm167, 1, 0
    %vm192 = vcmp.eq.s32.totalorder %v191, 1
    %vm193 = vmand %vm190, %vm192
    %v194 = vsub.f32 %v165, 1.0
    %v195 = vmin.f32 %v194, 1.0
    %v196 = vsel %vm193, %v195, 0.0
    %v197 = vsel %vm17, %v196, 0.0
    %198 = vadd.xlane.f32.xlu0 %v197
    %v199 = vpop.xlane.xlu0 %198
    %v200 = vsub.f32 %v165, %v196
    %v201 = vsub.f32 %v166, %v199
    %vm202 = vcmp.gt.f32.partialorder %v201, 10.0
    %v203 = vld [vmem:[%s2 + $0x4] sm:$0x1]
    %v204 = vand.u32 %v203, 2147483520
    %v205 = vor.u32 %v204, %v28
    %vm206 = vcmp.gt.f32.partialorder %v200, 1.0
    %vm207 = vmand %vm29, %vm206
    %v208 = vsel %vm207, %v205, 4294967295
    %v209 = vsel %vm17, %v208, 2147483648
    %v210 = vand.u32 %v209, 65535
    %v211 = vshra.s32 %v209, 16
    %v212 = vcvt.s32.f32 %v210
    %v213 = vcvt.s32.f32 %v211
    %214 = vmax.xlane.f32.xlu0 %v213
    %v215 = vpop.xlane.xlu0 %214
    %vm216 = vcmp.eq.f32.partialorder %v213, %v215
    %v217 = vsel %vm216, %v212, -inf
    %218 = vmax.xlane.f32.xlu0 %v217
    %v219 = vpop.xlane.xlu0 %218
    %v220 = vcvt.f32.s32 %v219
    %v221 = vcvt.f32.s32 %v215
    %v222 = vshll.u32 %v221, 16
    %v223 = vadd.s32 %v222, %v220
    %vm224 = vcmp.eq.s32.totalorder %v208, %v223
    %vm225 = vmand %vm207, %vm224
    %v226 = vsel %vm202, 1, 0
    %vm227 = vcmp.eq.s32.totalorder %v226, 1
    %vm228 = vmand %vm225, %vm227
    %v229 = vsub.f32 %v200, 1.0
    %v230 = vmin.f32 %v229, 1.0
    %v231 = vsel %vm228, %v230, 0.0
    %v232 = vsel %vm17, %v231, 0.0
    %233 = vadd.xlane.f32.xlu0 %v232
    %v234 = vpop.xlane.xlu0 %233
    %v235 = vsub.f32 %v200, %v231
    %v236 = vsub.f32 %v201, %v234
    %vm237 = vcmp.gt.f32.partialorder %v236, 10.0
    %v238 = vld [vmem:[%s2 + $0x5] sm:$0x1]
    %v239 = vand.u32 %v238, 2147483520
    %v240 = vor.u32 %v239, %v28
    %vm241 = vcmp.gt.f32.partialorder %v235, 1.0
    %vm242 = vmand %vm29, %vm241
    %v243 = vsel %vm242, %v240, 4294967295
    %v244 = vsel %vm17, %v243, 2147483648
    %v245 = vand.u32 %v244, 65535
    %v246 = vshra.s32 %v244, 16
    %v247 = vcvt.s32.f32 %v245
    %v248 = vcvt.s32.f32 %v246
    %249 = vmax.xlane.f32.xlu0 %v248
    %v250 = vpop.xlane.xlu0 %249
    %vm251 = vcmp.eq.f32.partialorder %v248, %v250
    %v252 = vsel %vm251, %v247, -inf
    %253 = vmax.xlane.f32.xlu0 %v252
    %v254 = vpop.xlane.xlu0 %253
    %v255 = vcvt.f32.s32 %v254
    %v256 = vcvt.f32.s32 %v250
    %v257 = vshll.u32 %v256, 16
    %v258 = vadd.s32 %v257, %v255
    %vm259 = vcmp.eq.s32.totalorder %v243, %v258
    %vm260 = vmand %vm242, %vm259
    %v261 = vsel %vm237, 1, 0
    %vm262 = vcmp.eq.s32.totalorder %v261, 1
    %vm263 = vmand %vm260, %vm262
    %v264 = vsub.f32 %v235, 1.0
    %v265 = vmin.f32 %v264, 1.0
    %v266 = vsel %vm263, %v265, 0.0
    %v267 = vsel %vm17, %v266, 0.0
    %268 = vadd.xlane.f32.xlu0 %v267
    %v269 = vpop.xlane.xlu0 %268
    %v270 = vsub.f32 %v235, %v266
    %v271 = vsub.f32 %v236, %v269
    %vm272 = vcmp.gt.f32.partialorder %v271, 10.0
    %v273 = vld [vmem:[%s2 + $0x6] sm:$0x1]
    %v274 = vand.u32 %v273, 2147483520
    %v275 = vor.u32 %v274, %v28
    %vm276 = vcmp.gt.f32.partialorder %v270, 1.0
    %vm277 = vmand %vm29, %vm276
    %v278 = vsel %vm277, %v275, 4294967295
    %v279 = vsel %vm17, %v278, 2147483648
    %v280 = vand.u32 %v279, 65535
    %v281 = vshra.s32 %v279, 16
    %v282 = vcvt.s32.f32 %v280
    %v283 = vcvt.s32.f32 %v281
    %284 = vmax.xlane.f32.xlu0 %v283
    %v285 = vpop.xlane.xlu0 %284
    %vm286 = vcmp.eq.f32.partialorder %v283, %v285
    %v287 = vsel %vm286, %v282, -inf
    %288 = vmax.xlane.f32.xlu0 %v287
    %v289 = vpop.xlane.xlu0 %288
    %v290 = vcvt.f32.s32 %v289
    %v291 = vcvt.f32.s32 %v285
    %v292 = vshll.u32 %v291, 16
    %v293 = vadd.s32 %v292, %v290
    %vm294 = vcmp.eq.s32.totalorder %v278, %v293
    %vm295 = vmand %vm277, %vm294
    %v296 = vsel %vm272, 1, 0
    %vm297 = vcmp.eq.s32.totalorder %v296, 1
    %vm298 = vmand %vm295, %vm297
    %v299 = vsub.f32 %v270, 1.0
    %v300 = vmin.f32 %v299, 1.0
    %v301 = vsel %vm298, %v300, 0.0
    %v302 = vsel %vm17, %v301, 0.0
    %303 = vadd.xlane.f32.xlu0 %v302
    %v304 = vpop.xlane.xlu0 %303
    %v305 = vsub.f32 %v270, %v301
    %v306 = vsub.f32 %v271, %v304
    %vm307 = vcmp.gt.f32.partialorder %v306, 10.0
    %v308 = vld [vmem:[%s2 + $0x7] sm:$0x1]
    %v309 = vand.u32 %v308, 2147483520
    %v310 = vor.u32 %v309, %v28
    %vm311 = vcmp.gt.f32.partialorder %v305, 1.0
    %vm312 = vmand %vm29, %vm311
    %v313 = vsel %vm312, %v310, 4294967295
    %v314 = vsel %vm17, %v313, 2147483648
    %v315 = vand.u32 %v314, 65535
    %v316 = vshra.s32 %v314, 16
    %v317 = vcvt.s32.f32 %v315
    %v318 = vcvt.s32.f32 %v316
    %319 = vmax.xlane.f32.xlu0 %v318
    %v320 = vpop.xlane.xlu0 %319
    %vm321 = vcmp.eq.f32.partialorder %v318, %v320
    %v322 = vsel %vm321, %v317, -inf
    %323 = vmax.xlane.f32.xlu0 %v322
    %v324 = vpop.xlane.xlu0 %323
    %v325 = vcvt.f32.s32 %v324
    %v326 = vcvt.f32.s32 %v320
    %v327 = vshll.u32 %v326, 16
    %v328 = vadd.s32 %v327, %v325
    %vm329 = vcmp.eq.s32.totalorder %v313, %v328
    %vm330 = vmand %vm312, %vm329
    %v331 = vsel %vm307, 1, 0
    %vm332 = vcmp.eq.s32.totalorder %v331, 1
    %vm333 = vmand %vm330, %vm332
    %v334 = vsub.f32 %v305, 1.0
    %v335 = vmin.f32 %v334, 1.0
    %v336 = vsel %vm333, %v335, 0.0
    %v337 = vsel %vm17, %v336, 0.0
    %338 = vadd.xlane.f32.xlu0 %v337
    %v339 = vpop.xlane.xlu0 %338
    %v340 = vsub.f32 %v305, %v336
    %v341 = vsub.f32 %v306, %v339
    %vm342 = vcmp.gt.f32.partialorder %v341, 10.0
    %v343 = vld [vmem:[%s2 + $0x8] sm:$0x1]
    %v344 = vand.u32 %v343, 2147483520
    %v345 = vor.u32 %v344, %v28
    %vm346 = vcmp.gt.f32.partialorder %v340, 1.0
    %vm347 = vmand %vm29, %vm346
    %v348 = vsel %vm347, %v345, 4294967295
    %v349 = vsel %vm17, %v348, 2147483648
    %v350 = vand.u32 %v349, 65535
    %v351 = vshra.s32 %v349, 16
    %v352 = vcvt.s32.f32 %v350
    %v353 = vcvt.s32.f32 %v351
    %354 = vmax.xlane.f32.xlu0 %v353
    %v355 = vpop.xlane.xlu0 %354
    %vm356 = vcmp.eq.f32.partialorder %v353, %v355
    %v357 = vsel %vm356, %v352, -inf
    %358 = vmax.xlane.f32.xlu0 %v357
    %v359 = vpop.xlane.xlu0 %358
    %v360 = vcvt.f32.s32 %v359
    %v361 = vcvt.f32.s32 %v355
    %v362 = vshll.u32 %v361, 16
    %v363 = vadd.s32 %v362, %v360
    %vm364 = vcmp.eq.s32.totalorder %v348, %v363
    %vm365 = vmand %vm347, %vm364
    %v366 = vsel %vm342, 1, 0
    %vm367 = vcmp.eq.s32.totalorder %v366, 1
    %vm368 = vmand %vm365, %vm367
    %v369 = vsub.f32 %v340, 1.0
    %v370 = vmin.f32 %v369, 1.0
    %v371 = vsel %vm368, %v370, 0.0
    %v372 = vsel %vm17, %v371, 0.0
    %373 = vadd.xlane.f32.xlu0 %v372
    %v374 = vpop.xlane.xlu0 %373
    %v375 = vsub.f32 %v340, %v371
    %v376 = vsub.f32 %v341, %v374
    %vm377 = vcmp.gt.f32.partialorder %v376, 10.0
    %v378 = vld [vmem:[%s2 + $0x9] sm:$0x1]
    %v379 = vand.u32 %v378, 2147483520
    %v380 = vor.u32 %v379, %v28
    %vm381 = vcmp.gt.f32.partialorder %v375, 1.0
    %vm382 = vmand %vm29, %vm381
    %v383 = vsel %vm382, %v380, 4294967295
    %v384 = vsel %vm17, %v383, 2147483648
    %v385 = vand.u32 %v384, 65535
    %v386 = vshra.s32 %v384, 16
    %v387 = vcvt.s32.f32 %v385
    %v388 = vcvt.s32.f32 %v386
    %389 = vmax.xlane.f32.xlu0 %v388
    %v390 = vpop.xlane.xlu0 %389
    %vm391 = vcmp.eq.f32.partialorder %v388, %v390
    %v392 = vsel %vm391, %v387, -inf
    %393 = vmax.xlane.f32.xlu0 %v392
    %v394 = vpop.xlane.xlu0 %393
    %v395 = vcvt.f32.s32 %v394
    %v396 = vcvt.f32.s32 %v390
    %v397 = vshll.u32 %v396, 16
    %v398 = vadd.s32 %v397, %v395
    %vm399 = vcmp.eq.s32.totalorder %v383, %v398
    %vm400 = vmand %vm382, %vm399
    %v401 = vsel %vm377, 1, 0
    %vm402 = vcmp.eq.s32.totalorder %v401, 1
    %vm403 = vmand %vm400, %vm402
    %v404 = vsub.f32 %v375, 1.0
    %v405 = vmin.f32 %v404, 1.0
    %v406 = vsel %vm403, %v405, 0.0
    %v407 = vsel %vm17, %v406, 0.0
    %408 = vadd.xlane.f32.xlu0 %v407
    %v409 = vpop.xlane.xlu0 %408
    %v410 = vsub.f32 %v375, %v406
    %v411 = vsub.f32 %v376, %v409
    %vm412 = vcmp.gt.f32.partialorder %v411, 10.0
    %v413 = vld [vmem:[%s2 + $0xa] sm:$0x1]
    %v414 = vand.u32 %v413, 2147483520
    %v415 = vor.u32 %v414, %v28
    %vm416 = vcmp.gt.f32.partialorder %v410, 1.0
    %vm417 = vmand %vm29, %vm416
    %v418 = vsel %vm417, %v415, 4294967295
    %v419 = vsel %vm17, %v418, 2147483648
    %v420 = vand.u32 %v419, 65535
    %v421 = vshra.s32 %v419, 16
    %v422 = vcvt.s32.f32 %v420
    %v423 = vcvt.s32.f32 %v421
    %424 = vmax.xlane.f32.xlu0 %v423
    %v425 = vpop.xlane.xlu0 %424
    %vm426 = vcmp.eq.f32.partialorder %v423, %v425
    %v427 = vsel %vm426, %v422, -inf
    %428 = vmax.xlane.f32.xlu0 %v427
    %v429 = vpop.xlane.xlu0 %428
    %v430 = vcvt.f32.s32 %v429
    %v431 = vcvt.f32.s32 %v425
    %v432 = vshll.u32 %v431, 16
    %v433 = vadd.s32 %v432, %v430
    %vm434 = vcmp.eq.s32.totalorder %v418, %v433
    %vm435 = vmand %vm417, %vm434
    %v436 = vsel %vm412, 1, 0
    %vm437 = vcmp.eq.s32.totalorder %v436, 1
    %vm438 = vmand %vm435, %vm437
    %v439 = vsub.f32 %v410, 1.0
    %v440 = vmin.f32 %v439, 1.0
    %v441 = vsel %vm438, %v440, 0.0
    %v442 = vsel %vm17, %v441, 0.0
    %443 = vadd.xlane.f32.xlu0 %v442
    %v444 = vpop.xlane.xlu0 %443
    %v445 = vsub.f32 %v410, %v441
    %v446 = vsub.f32 %v411, %v444
    %vm447 = vcmp.gt.f32.partialorder %v446, 10.0
    %v448 = vld [vmem:[%s2 + $0xb] sm:$0x1]
    %v449 = vand.u32 %v448, 2147483520
    %v450 = vor.u32 %v449, %v28
    %vm451 = vcmp.gt.f32.partialorder %v445, 1.0
    %vm452 = vmand %vm29, %vm451
    %v453 = vsel %vm452, %v450, 4294967295
    %v454 = vsel %vm17, %v453, 2147483648
    %v455 = vand.u32 %v454, 65535
    %v456 = vshra.s32 %v454, 16
    %v457 = vcvt.s32.f32 %v455
    %v458 = vcvt.s32.f32 %v456
    %459 = vmax.xlane.f32.xlu0 %v458
    %v460 = vpop.xlane.xlu0 %459
    %vm461 = vcmp.eq.f32.partialorder %v458, %v460
    %v462 = vsel %vm461, %v457, -inf
    %463 = vmax.xlane.f32.xlu0 %v462
    %v464 = vpop.xlane.xlu0 %463
    %v465 = vcvt.f32.s32 %v464
    %v466 = vcvt.f32.s32 %v460
    %v467 = vshll.u32 %v466, 16
    %v468 = vadd.s32 %v467, %v465
    %vm469 = vcmp.eq.s32.totalorder %v453, %v468
    %vm470 = vmand %vm452, %vm469
    %v471 = vsel %vm447, 1, 0
    %vm472 = vcmp.eq.s32.totalorder %v471, 1
    %vm473 = vmand %vm470, %vm472
    %v474 = vsub.f32 %v445, 1.0
    %v475 = vmin.f32 %v474, 1.0
    %v476 = vsel %vm473, %v475, 0.0
    %v477 = vsel %vm17, %v476, 0.0
    %478 = vadd.xlane.f32.xlu0 %v477
    %v479 = vpop.xlane.xlu0 %478
    %v480 = vsub.f32 %v445, %v476
    %v481 = vsub.f32 %v446, %v479
    %vm482 = vcmp.gt.f32.partialorder %v481, 10.0
    %v483 = vld [vmem:[%s2 + $0xc] sm:$0x1]
    %v484 = vand.u32 %v483, 2147483520
    %v485 = vor.u32 %v484, %v28
    %vm486 = vcmp.gt.f32.partialorder %v480, 1.0
    %vm487 = vmand %vm29, %vm486
    %v488 = vsel %vm487, %v485, 4294967295
    %v489 = vsel %vm17, %v488, 2147483648
    %v490 = vand.u32 %v489, 65535
    %v491 = vshra.s32 %v489, 16
    %v492 = vcvt.s32.f32 %v490
    %v493 = vcvt.s32.f32 %v491
    %494 = vmax.xlane.f32.xlu0 %v493
    %v495 = vpop.xlane.xlu0 %494
    %vm496 = vcmp.eq.f32.partialorder %v493, %v495
    %v497 = vsel %vm496, %v492, -inf
    %498 = vmax.xlane.f32.xlu0 %v497
    %v499 = vpop.xlane.xlu0 %498
    %v500 = vcvt.f32.s32 %v499
    %v501 = vcvt.f32.s32 %v495
    %v502 = vshll.u32 %v501, 16
    %v503 = vadd.s32 %v502, %v500
    %vm504 = vcmp.eq.s32.totalorder %v488, %v503
    %vm505 = vmand %vm487, %vm504
    %v506 = vsel %vm482, 1, 0
    %vm507 = vcmp.eq.s32.totalorder %v506, 1
    %vm508 = vmand %vm505, %vm507
    %v509 = vsub.f32 %v480, 1.0
    %v510 = vmin.f32 %v509, 1.0
    %v511 = vsel %vm508, %v510, 0.0
    %v512 = vsel %vm17, %v511, 0.0
    %513 = vadd.xlane.f32.xlu0 %v512
    %v514 = vpop.xlane.xlu0 %513
    %v515 = vsub.f32 %v480, %v511
    %v516 = vsub.f32 %v481, %v514
    %vm517 = vcmp.gt.f32.partialorder %v516, 10.0
    %v518 = vld [vmem:[%s2 + $0xd] sm:$0x1]
    %v519 = vand.u32 %v518, 2147483520
    %v520 = vor.u32 %v519, %v28
    %vm521 = vcmp.gt.f32.partialorder %v515, 1.0
    %vm522 = vmand %vm29, %vm521
    %v523 = vsel %vm522, %v520, 4294967295
    %v524 = vsel %vm17, %v523, 2147483648
    %v525 = vand.u32 %v524, 65535
    %v526 = vshra.s32 %v524, 16
    %v527 = vcvt.s32.f32 %v525
    %v528 = vcvt.s32.f32 %v526
    %529 = vmax.xlane.f32.xlu0 %v528
    %v530 = vpop.xlane.xlu0 %529
    %vm531 = vcmp.eq.f32.partialorder %v528, %v530
    %v532 = vsel %vm531, %v527, -inf
    %533 = vmax.xlane.f32.xlu0 %v532
    %v534 = vpop.xlane.xlu0 %533
    %v535 = vcvt.f32.s32 %v534
    %v536 = vcvt.f32.s32 %v530
    %v537 = vshll.u32 %v536, 16
    %v538 = vadd.s32 %v537, %v535
    %vm539 = vcmp.eq.s32.totalorder %v523, %v538
    %vm540 = vmand %vm522, %vm539
    %v541 = vsel %vm517, 1, 0
    %vm542 = vcmp.eq.s32.totalorder %v541, 1
    %vm543 = vmand %vm540, %vm542
    %v544 = vsub.f32 %v515, 1.0
    %v545 = vmin.f32 %v544, 1.0
    %v546 = vsel %vm543, %v545, 0.0
    %v547 = vsel %vm17, %v546, 0.0
    %548 = vadd.xlane.f32.xlu0 %v547
    %v549 = vpop.xlane.xlu0 %548
    %v550 = vsub.f32 %v515, %v546
    %v551 = vsub.f32 %v516, %v549
    %vm552 = vcmp.gt.f32.partialorder %v551, 10.0
    %v553 = vld [vmem:[%s2 + $0xe] sm:$0x1]
    %v554 = vand.u32 %v553, 2147483520
    %v555 = vor.u32 %v554, %v28
    %vm556 = vcmp.gt.f32.partialorder %v550, 1.0
    %vm557 = vmand %vm29, %vm556
    %v558 = vsel %vm557, %v555, 4294967295
    %v559 = vsel %vm17, %v558, 2147483648
    %v560 = vand.u32 %v559, 65535
    %v561 = vshra.s32 %v559, 16
    %v562 = vcvt.s32.f32 %v560
    %v563 = vcvt.s32.f32 %v561
    %564 = vmax.xlane.f32.xlu0 %v563
    %v565 = vpop.xlane.xlu0 %564
    %vm566 = vcmp.eq.f32.partialorder %v563, %v565
    %v567 = vsel %vm566, %v562, -inf
    %568 = vmax.xlane.f32.xlu0 %v567
    %v569 = vpop.xlane.xlu0 %568
    %v570 = vcvt.f32.s32 %v569
    %v571 = vcvt.f32.s32 %v565
    %v572 = vshll.u32 %v571, 16
    %v573 = vadd.s32 %v572, %v570
    %vm574 = vcmp.eq.s32.totalorder %v558, %v573
    %vm575 = vmand %vm557, %vm574
    %v576 = vsel %vm552, 1, 0
    %vm577 = vcmp.eq.s32.totalorder %v576, 1
    %vm578 = vmand %vm575, %vm577
    %v579 = vsub.f32 %v550, 1.0
    %v580 = vmin.f32 %v579, 1.0
    %v581 = vsel %vm578, %v580, 0.0
    %v582 = vsel %vm17, %v581, 0.0
    %583 = vadd.xlane.f32.xlu0 %v582
    %v584 = vpop.xlane.xlu0 %583
    %v585 = vsub.f32 %v550, %v581
    %v586 = vsub.f32 %v551, %v584
    %vm587 = vcmp.gt.f32.partialorder %v586, 10.0
    %v588 = vld [vmem:[%s2 + $0xf] sm:$0x1]
    %v589 = vand.u32 %v588, 2147483520
    %v590 = vor.u32 %v589, %v28
    %vm591 = vcmp.gt.f32.partialorder %v585, 1.0
    %vm592 = vmand %vm29, %vm591
    %v593 = vsel %vm592, %v590, 4294967295
    %v594 = vsel %vm17, %v593, 2147483648
    %v595 = vand.u32 %v594, 65535
    %v596 = vshra.s32 %v594, 16
    %v597 = vcvt.s32.f32 %v595
    %v598 = vcvt.s32.f32 %v596
    %599 = vmax.xlane.f32.xlu0 %v598
    %v600 = vpop.xlane.xlu0 %599
    %vm601 = vcmp.eq.f32.partialorder %v598, %v600
    %v602 = vsel %vm601, %v597, -inf
    %603 = vmax.xlane.f32.xlu0 %v602
    %v604 = vpop.xlane.xlu0 %603
    %v605 = vcvt.f32.s32 %v604
    %v606 = vcvt.f32.s32 %v600
    %v607 = vshll.u32 %v606, 16
    %v608 = vadd.s32 %v607, %v605
    %vm609 = vcmp.eq.s32.totalorder %v593, %v608
    %vm610 = vmand %vm592, %vm609
    %v611 = vsel %vm587, 1, 0
    %vm612 = vcmp.eq.s32.totalorder %v611, 1
    %vm613 = vmand %vm610, %vm612
    %v614 = vsub.f32 %v585, 1.0
    %v615 = vmin.f32 %v614, 1.0
    %v616 = vsel %vm613, %v615, 0.0
    %v617 = vsel %vm17, %v616, 0.0
    %618 = vadd.xlane.f32.xlu0 %v617
    %v619 = vpop.xlane.xlu0 %618
    %v620 = vsub.f32 %v585, %v616
    %v621 = vsub.f32 %v586, %v619
    %vm622 = vcmp.gt.f32.partialorder %v621, 10.0
    %v623 = vld [vmem:[%s2 + $0x10] sm:$0x1]
    %v624 = vand.u32 %v623, 2147483520
    %v625 = vor.u32 %v624, %v28
    %vm626 = vcmp.gt.f32.partialorder %v620, 1.0
    %vm627 = vmand %vm29, %vm626
    %v628 = vsel %vm627, %v625, 4294967295
    %v629 = vsel %vm17, %v628, 2147483648
    %v630 = vand.u32 %v629, 65535
    %v631 = vshra.s32 %v629, 16
    %v632 = vcvt.s32.f32 %v630
    %v633 = vcvt.s32.f32 %v631
    %634 = vmax.xlane.f32.xlu0 %v633
    %v635 = vpop.xlane.xlu0 %634
    %vm636 = vcmp.eq.f32.partialorder %v633, %v635
    %v637 = vsel %vm636, %v632, -inf
    %638 = vmax.xlane.f32.xlu0 %v637
    %v639 = vpop.xlane.xlu0 %638
    %v640 = vcvt.f32.s32 %v639
    %v641 = vcvt.f32.s32 %v635
    %v642 = vshll.u32 %v641, 16
    %v643 = vadd.s32 %v642, %v640
    %vm644 = vcmp.eq.s32.totalorder %v628, %v643
    %vm645 = vmand %vm627, %vm644
    %v646 = vsel %vm622, 1, 0
    %vm647 = vcmp.eq.s32.totalorder %v646, 1
    %vm648 = vmand %vm645, %vm647
    %v649 = vsub.f32 %v620, 1.0
    %v650 = vmin.f32 %v649, 1.0
    %v651 = vsel %vm648, %v650, 0.0
    %v652 = vsel %vm17, %v651, 0.0
    %653 = vadd.xlane.f32.xlu0 %v652
    %v654 = vpop.xlane.xlu0 %653
    %v655 = vsub.f32 %v620, %v651
    %v656 = vsub.f32 %v621, %v654
    %vm657 = vcmp.gt.f32.partialorder %v656, 10.0
    %v658 = vld [vmem:[%s2 + $0x11] sm:$0x1]
    %v659 = vand.u32 %v658, 2147483520
    %v660 = vor.u32 %v659, %v28
    %vm661 = vcmp.gt.f32.partialorder %v655, 1.0
    %vm662 = vmand %vm29, %vm661
    %v663 = vsel %vm662, %v660, 4294967295
    %v664 = vsel %vm17, %v663, 2147483648
    %v665 = vand.u32 %v664, 65535
    %v666 = vshra.s32 %v664, 16
    %v667 = vcvt.s32.f32 %v665
    %v668 = vcvt.s32.f32 %v666
    %669 = vmax.xlane.f32.xlu0 %v668
    %v670 = vpop.xlane.xlu0 %669
    %vm671 = vcmp.eq.f32.partialorder %v668, %v670
    %v672 = vsel %vm671, %v667, -inf
    %673 = vmax.xlane.f32.xlu0 %v672
    %v674 = vpop.xlane.xlu0 %673
    %v675 = vcvt.f32.s32 %v674
    %v676 = vcvt.f32.s32 %v670
    %v677 = vshll.u32 %v676, 16
    %v678 = vadd.s32 %v677, %v675
    %vm679 = vcmp.eq.s32.totalorder %v663, %v678
    %vm680 = vmand %vm662, %vm679
    %v681 = vsel %vm657, 1, 0
    %vm682 = vcmp.eq.s32.totalorder %v681, 1
    %vm683 = vmand %vm680, %vm682
    %v684 = vsub.f32 %v655, 1.0
    %v685 = vmin.f32 %v684, 1.0
    %v686 = vsel %vm683, %v685, 0.0
    %v687 = vsel %vm17, %v686, 0.0
    %688 = vadd.xlane.f32.xlu0 %v687
    %v689 = vpop.xlane.xlu0 %688
    %v690 = vsub.f32 %v655, %v686
    %v691 = vsub.f32 %v656, %v689
    %vm692 = vcmp.gt.f32.partialorder %v691, 10.0
    %v693 = vld [vmem:[%s2 + $0x12] sm:$0x1]
    %v694 = vand.u32 %v693, 2147483520
    %v695 = vor.u32 %v694, %v28
    %vm696 = vcmp.gt.f32.partialorder %v690, 1.0
    %vm697 = vmand %vm29, %vm696
    %v698 = vsel %vm697, %v695, 4294967295
    %v699 = vsel %vm17, %v698, 2147483648
    %v700 = vand.u32 %v699, 65535
    %v701 = vshra.s32 %v699, 16
    %v702 = vcvt.s32.f32 %v700
    %v703 = vcvt.s32.f32 %v701
    %704 = vmax.xlane.f32.xlu0 %v703
    %v705 = vpop.xlane.xlu0 %704
    %vm706 = vcmp.eq.f32.partialorder %v703, %v705
    %v707 = vsel %vm706, %v702, -inf
    %708 = vmax.xlane.f32.xlu0 %v707
    %v709 = vpop.xlane.xlu0 %708
    %v710 = vcvt.f32.s32 %v709
    %v711 = vcvt.f32.s32 %v705
    %v712 = vshll.u32 %v711, 16
    %v713 = vadd.s32 %v712, %v710
    %vm714 = vcmp.eq.s32.totalorder %v698, %v713
    %vm715 = vmand %vm697, %vm714
    %v716 = vsel %vm692, 1, 0
    %vm717 = vcmp.eq.s32.totalorder %v716, 1
    %vm718 = vmand %vm715, %vm717
    %v719 = vsub.f32 %v690, 1.0
    %v720 = vmin.f32 %v719, 1.0
    %v721 = vsel %vm718, %v720, 0.0
    %v722 = vsel %vm17, %v721, 0.0
    %723 = vadd.xlane.f32.xlu0 %v722
    %v724 = vpop.xlane.xlu0 %723
    %v725 = vsub.f32 %v690, %v721
    %v726 = vsub.f32 %v691, %v724
    %vm727 = vcmp.gt.f32.partialorder %v726, 10.0
    %v728 = vld [vmem:[%s2 + $0x13] sm:$0x1]
    %v729 = vand.u32 %v728, 2147483520
    %v730 = vor.u32 %v729, %v28
    %vm731 = vcmp.gt.f32.partialorder %v725, 1.0
    %vm732 = vmand %vm29, %vm731
    %v733 = vsel %vm732, %v730, 4294967295
    %v734 = vsel %vm17, %v733, 2147483648
    %v735 = vand.u32 %v734, 65535
    %v736 = vshra.s32 %v734, 16
    %v737 = vcvt.s32.f32 %v735
    %v738 = vcvt.s32.f32 %v736
    %739 = vmax.xlane.f32.xlu0 %v738
    %v740 = vpop.xlane.xlu0 %739
    %vm741 = vcmp.eq.f32.partialorder %v738, %v740
    %v742 = vsel %vm741, %v737, -inf
    %743 = vmax.xlane.f32.xlu0 %v742
    %v744 = vpop.xlane.xlu0 %743
    %v745 = vcvt.f32.s32 %v744
    %v746 = vcvt.f32.s32 %v740
    %v747 = vshll.u32 %v746, 16
    %v748 = vadd.s32 %v747, %v745
    %vm749 = vcmp.eq.s32.totalorder %v733, %v748
    %vm750 = vmand %vm732, %vm749
    %v751 = vsel %vm727, 1, 0
    %vm752 = vcmp.eq.s32.totalorder %v751, 1
    %vm753 = vmand %vm750, %vm752
    %v754 = vsub.f32 %v725, 1.0
    %v755 = vmin.f32 %v754, 1.0
    %v756 = vsel %vm753, %v755, 0.0
    %v757 = vsel %vm17, %v756, 0.0
    %758 = vadd.xlane.f32.xlu0 %v757
    %v759 = vpop.xlane.xlu0 %758
    %v760 = vsub.f32 %v725, %v756
    %v761 = vsub.f32 %v726, %v759
    %vm762 = vcmp.gt.f32.partialorder %v761, 10.0
    %v763 = vld [vmem:[%s2 + $0x14] sm:$0x1]
    %v764 = vand.u32 %v763, 2147483520
    %v765 = vor.u32 %v764, %v28
    %vm766 = vcmp.gt.f32.partialorder %v760, 1.0
    %vm767 = vmand %vm29, %vm766
    %v768 = vsel %vm767, %v765, 4294967295
    %v769 = vsel %vm17, %v768, 2147483648
    %v770 = vand.u32 %v769, 65535
    %v771 = vshra.s32 %v769, 16
    %v772 = vcvt.s32.f32 %v770
    %v773 = vcvt.s32.f32 %v771
    %774 = vmax.xlane.f32.xlu0 %v773
    %v775 = vpop.xlane.xlu0 %774
    %vm776 = vcmp.eq.f32.partialorder %v773, %v775
    %v777 = vsel %vm776, %v772, -inf
    %778 = vmax.xlane.f32.xlu0 %v777
    %v779 = vpop.xlane.xlu0 %778
    %v780 = vcvt.f32.s32 %v779
    %v781 = vcvt.f32.s32 %v775
    %v782 = vshll.u32 %v781, 16
    %v783 = vadd.s32 %v782, %v780
    %vm784 = vcmp.eq.s32.totalorder %v768, %v783
    %vm785 = vmand %vm767, %vm784
    %v786 = vsel %vm762, 1, 0
    %vm787 = vcmp.eq.s32.totalorder %v786, 1
    %vm788 = vmand %vm785, %vm787
    %v789 = vsub.f32 %v760, 1.0
    %v790 = vmin.f32 %v789, 1.0
    %v791 = vsel %vm788, %v790, 0.0
    %v792 = vsel %vm17, %v791, 0.0
    %793 = vadd.xlane.f32.xlu0 %v792
    %v794 = vpop.xlane.xlu0 %793
    %v795 = vsub.f32 %v760, %v791
    %v796 = vsub.f32 %v761, %v794
    %vm797 = vcmp.gt.f32.partialorder %v796, 10.0
    %v798 = vld [vmem:[%s2 + $0x15] sm:$0x1]
    %v799 = vand.u32 %v798, 2147483520
    %v800 = vor.u32 %v799, %v28
    %vm801 = vcmp.gt.f32.partialorder %v795, 1.0
    %vm802 = vmand %vm29, %vm801
    %v803 = vsel %vm802, %v800, 4294967295
    %v804 = vsel %vm17, %v803, 2147483648
    %v805 = vand.u32 %v804, 65535
    %v806 = vshra.s32 %v804, 16
    %v807 = vcvt.s32.f32 %v805
    %v808 = vcvt.s32.f32 %v806
    %809 = vmax.xlane.f32.xlu0 %v808
    %v810 = vpop.xlane.xlu0 %809
    %vm811 = vcmp.eq.f32.partialorder %v808, %v810
    %v812 = vsel %vm811, %v807, -inf
    %813 = vmax.xlane.f32.xlu0 %v812
    %v814 = vpop.xlane.xlu0 %813
    %v815 = vcvt.f32.s32 %v814
    %v816 = vcvt.f32.s32 %v810
    %v817 = vshll.u32 %v816, 16
    %v818 = vadd.s32 %v817, %v815
    %vm819 = vcmp.eq.s32.totalorder %v803, %v818
    %vm820 = vmand %vm802, %vm819
    %v821 = vsel %vm797, 1, 0
    %vm822 = vcmp.eq.s32.totalorder %v821, 1
    %vm823 = vmand %vm820, %vm822
    %v824 = vsub.f32 %v795, 1.0
    %v825 = vmin.f32 %v824, 1.0
    %v826 = vsel %vm823, %v825, 0.0
    %v827 = vsel %vm17, %v826, 0.0
    %828 = vadd.xlane.f32.xlu0 %v827
    %v829 = vpop.xlane.xlu0 %828
    %v830 = vsub.f32 %v795, %v826
    %v831 = vsub.f32 %v796, %v829
    %vm832 = vcmp.gt.f32.partialorder %v831, 10.0
    %v833 = vld [vmem:[%s2 + $0x16] sm:$0x1]
    %v834 = vand.u32 %v833, 2147483520
    %v835 = vor.u32 %v834, %v28
    %vm836 = vcmp.gt.f32.partialorder %v830, 1.0
    %vm837 = vmand %vm29, %vm836
    %v838 = vsel %vm837, %v835, 4294967295
    %v839 = vsel %vm17, %v838, 2147483648
    %v840 = vand.u32 %v839, 65535
    %v841 = vshra.s32 %v839, 16
    %v842 = vcvt.s32.f32 %v840
    %v843 = vcvt.s32.f32 %v841
    %844 = vmax.xlane.f32.xlu0 %v843
    %v845 = vpop.xlane.xlu0 %844
    %vm846 = vcmp.eq.f32.partialorder %v843, %v845
    %v847 = vsel %vm846, %v842, -inf
    %848 = vmax.xlane.f32.xlu0 %v847
    %v849 = vpop.xlane.xlu0 %848
    %v850 = vcvt.f32.s32 %v849
    %v851 = vcvt.f32.s32 %v845
    %v852 = vshll.u32 %v851, 16
    %v853 = vadd.s32 %v852, %v850
    %vm854 = vcmp.eq.s32.totalorder %v838, %v853
    %vm855 = vmand %vm837, %vm854
    %v856 = vsel %vm832, 1, 0
    %vm857 = vcmp.eq.s32.totalorder %v856, 1
    %vm858 = vmand %vm855, %vm857
    %v859 = vsub.f32 %v830, 1.0
    %v860 = vmin.f32 %v859, 1.0
    %v861 = vsel %vm858, %v860, 0.0
    %v862 = vsel %vm17, %v861, 0.0
    %863 = vadd.xlane.f32.xlu0 %v862
    %v864 = vpop.xlane.xlu0 %863
    %v865 = vsub.f32 %v830, %v861
    %v866 = vsub.f32 %v831, %v864
    %vm867 = vcmp.gt.f32.partialorder %v866, 10.0
    %v868 = vld [vmem:[%s2 + $0x17] sm:$0x1]
    %v869 = vand.u32 %v868, 2147483520
    %v870 = vor.u32 %v869, %v28
    %vm871 = vcmp.gt.f32.partialorder %v865, 1.0
    %vm872 = vmand %vm29, %vm871
    %v873 = vsel %vm872, %v870, 4294967295
    %v874 = vsel %vm17, %v873, 2147483648
    %v875 = vand.u32 %v874, 65535
    %v876 = vshra.s32 %v874, 16
    %v877 = vcvt.s32.f32 %v875
    %v878 = vcvt.s32.f32 %v876
    %879 = vmax.xlane.f32.xlu0 %v878
    %v880 = vpop.xlane.xlu0 %879
    %vm881 = vcmp.eq.f32.partialorder %v878, %v880
    %v882 = vsel %vm881, %v877, -inf
    %883 = vmax.xlane.f32.xlu0 %v882
    %v884 = vpop.xlane.xlu0 %883
    %v885 = vcvt.f32.s32 %v884
    %v886 = vcvt.f32.s32 %v880
    %v887 = vshll.u32 %v886, 16
    %v888 = vadd.s32 %v887, %v885
    %vm889 = vcmp.eq.s32.totalorder %v873, %v888
    %vm890 = vmand %vm872, %vm889
    %v891 = vsel %vm867, 1, 0
    %vm892 = vcmp.eq.s32.totalorder %v891, 1
    %vm893 = vmand %vm890, %vm892
    %v894 = vsub.f32 %v865, 1.0
    %v895 = vmin.f32 %v894, 1.0
    %v896 = vsel %vm893, %v895, 0.0
    %v897 = vsel %vm17, %v896, 0.0
    %898 = vadd.xlane.f32.xlu0 %v897
    %v899 = vpop.xlane.xlu0 %898
    %v900 = vsub.f32 %v865, %v896
    %v901 = vsub.f32 %v866, %v899
    %vm902 = vcmp.gt.f32.partialorder %v901, 10.0
    %v903 = vld [vmem:[%s2 + $0x18] sm:$0x1]
    %v904 = vand.u32 %v903, 2147483520
    %v905 = vor.u32 %v904, %v28
    %vm906 = vcmp.gt.f32.partialorder %v900, 1.0
    %vm907 = vmand %vm29, %vm906
    %v908 = vsel %vm907, %v905, 4294967295
    %v909 = vsel %vm17, %v908, 2147483648
    %v910 = vand.u32 %v909, 65535
    %v911 = vshra.s32 %v909, 16
    %v912 = vcvt.s32.f32 %v910
    %v913 = vcvt.s32.f32 %v911
    %914 = vmax.xlane.f32.xlu0 %v913
    %v915 = vpop.xlane.xlu0 %914
    %vm916 = vcmp.eq.f32.partialorder %v913, %v915
    %v917 = vsel %vm916, %v912, -inf
    %918 = vmax.xlane.f32.xlu0 %v917
    %v919 = vpop.xlane.xlu0 %918
    %v920 = vcvt.f32.s32 %v919
    %v921 = vcvt.f32.s32 %v915
    %v922 = vshll.u32 %v921, 16
    %v923 = vadd.s32 %v922, %v920
    %vm924 = vcmp.eq.s32.totalorder %v908, %v923
    %vm925 = vmand %vm907, %vm924
    %v926 = vsel %vm902, 1, 0
    %vm927 = vcmp.eq.s32.totalorder %v926, 1
    %vm928 = vmand %vm925, %vm927
    %v929 = vsub.f32 %v900, 1.0
    %v930 = vmin.f32 %v929, 1.0
    %v931 = vsel %vm928, %v930, 0.0
    %v932 = vsel %vm17, %v931, 0.0
    %933 = vadd.xlane.f32.xlu0 %v932
    %v934 = vpop.xlane.xlu0 %933
    %v935 = vsub.f32 %v900, %v931
    %v936 = vsub.f32 %v901, %v934
    %vm937 = vcmp.gt.f32.partialorder %v936, 10.0
    %v938 = vld [vmem:[%s2 + $0x19] sm:$0x1]
    %v939 = vand.u32 %v938, 2147483520
    %v940 = vor.u32 %v939, %v28
    %vm941 = vcmp.gt.f32.partialorder %v935, 1.0
    %vm942 = vmand %vm29, %vm941
    %v943 = vsel %vm942, %v940, 4294967295
    %v944 = vsel %vm17, %v943, 2147483648
    %v945 = vand.u32 %v944, 65535
    %v946 = vshra.s32 %v944, 16
    %v947 = vcvt.s32.f32 %v945
    %v948 = vcvt.s32.f32 %v946
    %949 = vmax.xlane.f32.xlu0 %v948
    %v950 = vpop.xlane.xlu0 %949
    %vm951 = vcmp.eq.f32.partialorder %v948, %v950
    %v952 = vsel %vm951, %v947, -inf
    %953 = vmax.xlane.f32.xlu0 %v952
    %v954 = vpop.xlane.xlu0 %953
    %v955 = vcvt.f32.s32 %v954
    %v956 = vcvt.f32.s32 %v950
    %v957 = vshll.u32 %v956, 16
    %v958 = vadd.s32 %v957, %v955
    %vm959 = vcmp.eq.s32.totalorder %v943, %v958
    %vm960 = vmand %vm942, %vm959
    %v961 = vsel %vm937, 1, 0
    %vm962 = vcmp.eq.s32.totalorder %v961, 1
    %vm963 = vmand %vm960, %vm962
    %v964 = vsub.f32 %v935, 1.0
    %v965 = vmin.f32 %v964, 1.0
    %v966 = vsel %vm963, %v965, 0.0
    %v967 = vsel %vm17, %v966, 0.0
    %968 = vadd.xlane.f32.xlu0 %v967
    %v969 = vpop.xlane.xlu0 %968
    %v970 = vsub.f32 %v935, %v966
    %v971 = vsub.f32 %v936, %v969
    %vm972 = vcmp.gt.f32.partialorder %v971, 10.0
    %v973 = vld [vmem:[%s2 + $0x1a] sm:$0x1]
    %v974 = vand.u32 %v973, 2147483520
    %v975 = vor.u32 %v974, %v28
    %vm976 = vcmp.gt.f32.partialorder %v970, 1.0
    %vm977 = vmand %vm29, %vm976
    %v978 = vsel %vm977, %v975, 4294967295
    %v979 = vsel %vm17, %v978, 2147483648
    %v980 = vand.u32 %v979, 65535
    %v981 = vshra.s32 %v979, 16
    %v982 = vcvt.s32.f32 %v980
    %v983 = vcvt.s32.f32 %v981
    %984 = vmax.xlane.f32.xlu0 %v983
    %v985 = vpop.xlane.xlu0 %984
    %vm986 = vcmp.eq.f32.partialorder %v983, %v985
    %v987 = vsel %vm986, %v982, -inf
    %988 = vmax.xlane.f32.xlu0 %v987
    %v989 = vpop.xlane.xlu0 %988
    %v990 = vcvt.f32.s32 %v989
    %v991 = vcvt.f32.s32 %v985
    %v992 = vshll.u32 %v991, 16
    %v993 = vadd.s32 %v992, %v990
    %vm994 = vcmp.eq.s32.totalorder %v978, %v993
    %vm995 = vmand %vm977, %vm994
    %v996 = vsel %vm972, 1, 0
    %vm997 = vcmp.eq.s32.totalorder %v996, 1
    %vm998 = vmand %vm995, %vm997
    %v999 = vsub.f32 %v970, 1.0
    %v1000 = vmin.f32 %v999, 1.0
    %v1001 = vsel %vm998, %v1000, 0.0
    %v1002 = vsel %vm17, %v1001, 0.0
    %1003 = vadd.xlane.f32.xlu0 %v1002
    %v1004 = vpop.xlane.xlu0 %1003
    %v1005 = vsub.f32 %v970, %v1001
    %v1006 = vsub.f32 %v971, %v1004
    %vm1007 = vcmp.gt.f32.partialorder %v1006, 10.0
    %v1008 = vld [vmem:[%s2 + $0x1b] sm:$0x1]
    %v1009 = vand.u32 %v1008, 2147483520
    %v1010 = vor.u32 %v1009, %v28
    %vm1011 = vcmp.gt.f32.partialorder %v1005, 1.0
    %vm1012 = vmand %vm29, %vm1011
    %v1013 = vsel %vm1012, %v1010, 4294967295
    %v1014 = vsel %vm17, %v1013, 2147483648
    %v1015 = vand.u32 %v1014, 65535
    %v1016 = vshra.s32 %v1014, 16
    %v1017 = vcvt.s32.f32 %v1015
    %v1018 = vcvt.s32.f32 %v1016
    %1019 = vmax.xlane.f32.xlu0 %v1018
    %v1020 = vpop.xlane.xlu0 %1019
    %vm1021 = vcmp.eq.f32.partialorder %v1018, %v1020
    %v1022 = vsel %vm1021, %v1017, -inf
    %1023 = vmax.xlane.f32.xlu0 %v1022
    %v1024 = vpop.xlane.xlu0 %1023
    %v1025 = vcvt.f32.s32 %v1024
    %v1026 = vcvt.f32.s32 %v1020
    %v1027 = vshll.u32 %v1026, 16
    %v1028 = vadd.s32 %v1027, %v1025
    %vm1029 = vcmp.eq.s32.totalorder %v1013, %v1028
    %vm1030 = vmand %vm1012, %vm1029
    %v1031 = vsel %vm1007, 1, 0
    %vm1032 = vcmp.eq.s32.totalorder %v1031, 1
    %vm1033 = vmand %vm1030, %vm1032
    %v1034 = vsub.f32 %v1005, 1.0
    %v1035 = vmin.f32 %v1034, 1.0
    %v1036 = vsel %vm1033, %v1035, 0.0
    %v1037 = vsel %vm17, %v1036, 0.0
    %1038 = vadd.xlane.f32.xlu0 %v1037
    %v1039 = vpop.xlane.xlu0 %1038
    %v1040 = vsub.f32 %v1005, %v1036
    %v1041 = vsub.f32 %v1006, %v1039
    %vm1042 = vcmp.gt.f32.partialorder %v1041, 10.0
    %v1043 = vld [vmem:[%s2 + $0x1c] sm:$0x1]
    %v1044 = vand.u32 %v1043, 2147483520
    %v1045 = vor.u32 %v1044, %v28
    %vm1046 = vcmp.gt.f32.partialorder %v1040, 1.0
    %vm1047 = vmand %vm29, %vm1046
    %v1048 = vsel %vm1047, %v1045, 4294967295
    %v1049 = vsel %vm17, %v1048, 2147483648
    %v1050 = vand.u32 %v1049, 65535
    %v1051 = vshra.s32 %v1049, 16
    %v1052 = vcvt.s32.f32 %v1050
    %v1053 = vcvt.s32.f32 %v1051
    %1054 = vmax.xlane.f32.xlu0 %v1053
    %v1055 = vpop.xlane.xlu0 %1054
    %vm1056 = vcmp.eq.f32.partialorder %v1053, %v1055
    %v1057 = vsel %vm1056, %v1052, -inf
    %1058 = vmax.xlane.f32.xlu0 %v1057
    %v1059 = vpop.xlane.xlu0 %1058
    %v1060 = vcvt.f32.s32 %v1059
    %v1061 = vcvt.f32.s32 %v1055
    %v1062 = vshll.u32 %v1061, 16
    %v1063 = vadd.s32 %v1062, %v1060
    %vm1064 = vcmp.eq.s32.totalorder %v1048, %v1063
    %vm1065 = vmand %vm1047, %vm1064
    %v1066 = vsel %vm1042, 1, 0
    %vm1067 = vcmp.eq.s32.totalorder %v1066, 1
    %vm1068 = vmand %vm1065, %vm1067
    %v1069 = vsub.f32 %v1040, 1.0
    %v1070 = vmin.f32 %v1069, 1.0
    %v1071 = vsel %vm1068, %v1070, 0.0
    %v1072 = vsel %vm17, %v1071, 0.0
    %1073 = vadd.xlane.f32.xlu0 %v1072
    %v1074 = vpop.xlane.xlu0 %1073
    %v1075 = vsub.f32 %v1040, %v1071
    %v1076 = vsub.f32 %v1041, %v1074
    %vm1077 = vcmp.gt.f32.partialorder %v1076, 10.0
    %v1078 = vld [vmem:[%s2 + $0x1d] sm:$0x1]
    %v1079 = vand.u32 %v1078, 2147483520
    %v1080 = vor.u32 %v1079, %v28
    %vm1081 = vcmp.gt.f32.partialorder %v1075, 1.0
    %vm1082 = vmand %vm29, %vm1081
    %v1083 = vsel %vm1082, %v1080, 4294967295
    %v1084 = vsel %vm17, %v1083, 2147483648
    %v1085 = vand.u32 %v1084, 65535
    %v1086 = vshra.s32 %v1084, 16
    %v1087 = vcvt.s32.f32 %v1085
    %v1088 = vcvt.s32.f32 %v1086
    %1089 = vmax.xlane.f32.xlu0 %v1088
    %v1090 = vpop.xlane.xlu0 %1089
    %vm1091 = vcmp.eq.f32.partialorder %v1088, %v1090
    %v1092 = vsel %vm1091, %v1087, -inf
    %1093 = vmax.xlane.f32.xlu0 %v1092
    %v1094 = vpop.xlane.xlu0 %1093
    %v1095 = vcvt.f32.s32 %v1094
    %v1096 = vcvt.f32.s32 %v1090
    %v1097 = vshll.u32 %v1096, 16
    %v1098 = vadd.s32 %v1097, %v1095
    %vm1099 = vcmp.eq.s32.totalorder %v1083, %v1098
    %vm1100 = vmand %vm1082, %vm1099
    %v1101 = vsel %vm1077, 1, 0
    %vm1102 = vcmp.eq.s32.totalorder %v1101, 1
    %vm1103 = vmand %vm1100, %vm1102
    %v1104 = vsub.f32 %v1075, 1.0
    %v1105 = vmin.f32 %v1104, 1.0
    %v1106 = vsel %vm1103, %v1105, 0.0
    %v1107 = vsel %vm17, %v1106, 0.0
    %1108 = vadd.xlane.f32.xlu0 %v1107
    %v1109 = vpop.xlane.xlu0 %1108
    %v1110 = vsub.f32 %v1075, %v1106
    %v1111 = vsub.f32 %v1076, %v1109
    %vm1112 = vcmp.gt.f32.partialorder %v1111, 10.0
    %v1113 = vld [vmem:[%s2 + $0x1e] sm:$0x1]
    %v1114 = vand.u32 %v1113, 2147483520
    %v1115 = vor.u32 %v1114, %v28
    %vm1116 = vcmp.gt.f32.partialorder %v1110, 1.0
    %vm1117 = vmand %vm29, %vm1116
    %v1118 = vsel %vm1117, %v1115, 4294967295
    %v1119 = vsel %vm17, %v1118, 2147483648
    %v1120 = vand.u32 %v1119, 65535
    %v1121 = vshra.s32 %v1119, 16
    %v1122 = vcvt.s32.f32 %v1120
    %v1123 = vcvt.s32.f32 %v1121
    %1124 = vmax.xlane.f32.xlu0 %v1123
    %v1125 = vpop.xlane.xlu0 %1124
    %vm1126 = vcmp.eq.f32.partialorder %v1123, %v1125
    %v1127 = vsel %vm1126, %v1122, -inf
    %1128 = vmax.xlane.f32.xlu0 %v1127
    %v1129 = vpop.xlane.xlu0 %1128
    %v1130 = vcvt.f32.s32 %v1129
    %v1131 = vcvt.f32.s32 %v1125
    %v1132 = vshll.u32 %v1131, 16
    %v1133 = vadd.s32 %v1132, %v1130
    %vm1134 = vcmp.eq.s32.totalorder %v1118, %v1133
    %vm1135 = vmand %vm1117, %vm1134
    %v1136 = vsel %vm1112, 1, 0
    %vm1137 = vcmp.eq.s32.totalorder %v1136, 1
    %vm1138 = vmand %vm1135, %vm1137
    %v1139 = vsub.f32 %v1110, 1.0
    %v1140 = vmin.f32 %v1139, 1.0
    %v1141 = vsel %vm1138, %v1140, 0.0
    %v1142 = vsel %vm17, %v1141, 0.0
    %1143 = vadd.xlane.f32.xlu0 %v1142
    %v1144 = vpop.xlane.xlu0 %1143
    %v1145 = vsub.f32 %v1110, %v1141
    %v1146 = vsub.f32 %v1111, %v1144
    %vm1147 = vcmp.gt.f32.partialorder %v1146, 10.0
    %v1148 = vld [vmem:[%s2 + $0x1f] sm:$0x1]
    %v1149 = vand.u32 %v1148, 2147483520
    %v1150 = vor.u32 %v1149, %v28
    %vm1151 = vcmp.gt.f32.partialorder %v1145, 1.0
    %vm1152 = vmand %vm29, %vm1151
    %v1153 = vsel %vm1152, %v1150, 4294967295
    %v1154 = vsel %vm17, %v1153, 2147483648
    %v1155 = vand.u32 %v1154, 65535
    %v1156 = vshra.s32 %v1154, 16
    %v1157 = vcvt.s32.f32 %v1155
    %v1158 = vcvt.s32.f32 %v1156
    %1159 = vmax.xlane.f32.xlu0 %v1158
    %v1160 = vpop.xlane.xlu0 %1159
    %vm1161 = vcmp.eq.f32.partialorder %v1158, %v1160
    %v1162 = vsel %vm1161, %v1157, -inf
    %1163 = vmax.xlane.f32.xlu0 %v1162
    %v1164 = vpop.xlane.xlu0 %1163
    %v1165 = vcvt.f32.s32 %v1164
    %v1166 = vcvt.f32.s32 %v1160
    %v1167 = vshll.u32 %v1166, 16
    %v1168 = vadd.s32 %v1167, %v1165
    %vm1169 = vcmp.eq.s32.totalorder %v1153, %v1168
    %vm1170 = vmand %vm1152, %vm1169
    %v1171 = vsel %vm1147, 1, 0
    %vm1172 = vcmp.eq.s32.totalorder %v1171, 1
    %vm1173 = vmand %vm1170, %vm1172
    %v1174 = vsub.f32 %v1145, 1.0
    %v1175 = vmin.f32 %v1174, 1.0
    %v1176 = vsel %vm1173, %v1175, 0.0
    %v1177 = vsub.f32 %v1145, %v1176
    %1178 = vst [vmem:[%s3] sm:$0x1] %v1177
  $region17: #{net_forward.1} parent=0 // pred_fallthru
    _
  // Predicated region
  $region18: #{net_forward.1} parent=0 // pred_check
    _
  $region19: #{net_forward.1} parent=0 // pred_check_branch
    %1180 = sbr.rel (0) target = $region21
  $region20: #{net_forward.1} parent=0 // pred_region
    _
  $region21: #{net_forward.1} parent=0 // pred_fallthru
    _
  // Predicated region
  $region22: #{net_forward.1} parent=0 // pred_check
    _
  $region23: #{net_forward.1} parent=0 // pred_check_branch
    %1182 = sbr.rel (0) target = $region25
  $region24: #{net_forward.1} parent=0 // pred_region
    _
  $region25: #{net_forward.1} parent=0 // pred_fallthru
    _

</llo_original>
